<compile_context>
chip_gen: v7x
topology: tpu7x:2x2x1
jax: 0.10.0
libtpu: 0.0.40
codegen_flags: <defaults>
</compile_context>

<pallas_src>
import math

import jax
import jax.numpy as jnp
from jax.experimental import pallas as pl
from jax.experimental.pallas import tpu as pltpu


def _make_cross_attention_kernel(n_heads: int, d_embed: int, exp_dtype):
    d_head = d_embed // n_heads

    def kernel(x_ref, ctx_ref, wq_ref, bq_ref, wk_ref, bk_ref, wv_ref, bv_ref,
               wo_ref, o_ref, k_scratch, v_scratch, q_scratch, o_scratch):
        qi = pl.program_id(1)

        # K/V projections depend only on the batch index: compute once per
        # batch element (first q tile) and cache them head-major in VMEM.
        @pl.when(qi == 0)
        def _():
            ctx = ctx_ref[0]                                     # (S_kv, d_cross) bf16
            k = jnp.dot(ctx, wk_ref[...],
                        preferred_element_type=jnp.float32) + bk_ref[...]
            v = jnp.dot(ctx, wv_ref[...],
                        preferred_element_type=jnp.float32) + bv_ref[...]
            kb = k.astype(k_scratch.dtype)
            vb = v.astype(v_scratch.dtype)
            # Head-major relayout via slice-stores; amortized over all q tiles
            # of this batch element.
            for h in range(n_heads):
                lo = h * d_head
                k_scratch[h] = kb[:, lo:lo + d_head]
                v_scratch[h] = vb[:, lo:lo + d_head]

        # Q projection for this q tile; wq/bq are pre-scaled by 1/sqrt(d_head).
        x = x_ref[0]                                             # (tq, d_embed) bf16
        q = (jnp.dot(x, wq_ref[...], preferred_element_type=jnp.float32)
             + bq_ref[...]).astype(jnp.bfloat16)                 # (tq, d_embed)
        for h in range(n_heads):
            lo = h * d_head
            q_scratch[h] = q[:, lo:lo + d_head]                  # head-major staging

        qh = q_scratch[...]                                      # (H, tq, d_head) bf16
        kh = k_scratch[...]                                      # (H, S_kv, d_head) bf16
        vh = v_scratch[...]                                      # (H, S_kv, d_head) bf16

        # Head-batched attention: one MXU contraction over all heads.
        s = jnp.einsum('hqd,hkd->hqk', qh, kh,
                       preferred_element_type=jnp.float32)       # (H, tq, S_kv) f32
        s_max = jnp.max(s, axis=-1, keepdims=True)
        p = jnp.exp((s - s_max).astype(exp_dtype))               # bf16 exp on >= v6e
        denom = jnp.sum(p.astype(jnp.float32), axis=-1, keepdims=True)  # (H, tq, 1)

        pv = jnp.einsum('hqk,hkd->hqd', p.astype(jnp.bfloat16), vh,
                        preferred_element_type=jnp.float32)      # (H, tq, d_head) f32
        # Deferred softmax normalization on the small (H, tq, d_head) tile.
        pv = (pv * pl.reciprocal(denom, approx=True)).astype(jnp.bfloat16)

        # Concatenate heads and do ONE full-depth output projection.
        for h in range(n_heads):
            lo = h * d_head
            o_scratch[:, lo:lo + d_head] = pv[h]
        o_ref[0] = jnp.dot(o_scratch[...], wo_ref[...],
                           preferred_element_type=jnp.float32).astype(o_ref.dtype)

    return kernel


def _vmem_capacity_bytes() -> int:
    try:
        return int(pltpu.get_tpu_info().vmem_capacity_bytes)
    except Exception:
        return 64 * 1024 * 1024   # conservative (v7x-sized) fallback


def _softmax_exp_dtype():
    """bf16 exp on v6e / v7x (bf16 EUP exists); f32 on v5e and older."""
    try:
        kind = jax.devices()[0].device_kind.lower()
    except Exception:
        return jnp.float32
    if any(tag in kind for tag in ("v2", "v3", "v4", "v5")):
        return jnp.float32
    return jnp.bfloat16


def _estimate_vmem_bytes(tq, s_kv, d_embed, d_cross, n_heads, out_bytes):
    """Rough resident-set estimate (bytes) for one grid step."""
    bf16 = 2
    d_head = d_embed // n_heads
    d_head_pad = ((d_head + 127) // 128) * 128      # lane padding of head-major scratch
    weights = bf16 * (2 * d_embed * d_embed + 2 * d_cross * d_embed)   # single-buffered
    biases = 3 * 4 * d_embed
    ctx_blk = 2 * bf16 * s_kv * d_cross                                # double-buffered
    x_blk = 2 * bf16 * tq * d_embed
    o_blk = 2 * out_bytes * tq * d_embed
    kv_scratch = 2 * bf16 * n_heads * s_kv * d_head_pad
    q_scratch = bf16 * n_heads * tq * d_head_pad
    o_scratch = bf16 * tq * d_embed
    # live intermediates: f32 scores + probs (H, tq, S_kv), pv, q, out
    inter = (n_heads * tq * s_kv * 8 + n_heads * tq * d_head_pad * 4
             + 3 * tq * d_embed * 4)
    return (weights + biases + ctx_blk + x_blk + o_blk
            + kv_scratch + q_scratch + o_scratch + inter)


def _pick_q_tile(s_q, s_kv, d_embed, d_cross, n_heads, out_bytes, budget):
    """Largest q tile (divisor of S_q, multiple of 8) fitting the VMEM budget."""
    candidates = [t for t in (1024, 512, 256, 128, 64, 32, 16, 8)
                  if t < s_q and s_q % t == 0]
    if s_q <= 1024:
        candidates = [s_q] + candidates
    for t in candidates:
        if _estimate_vmem_bytes(t, s_kv, d_embed, d_cross, n_heads,
                                out_bytes) <= budget:
            return t
    # TODO(synk): if even the smallest tile overflows (huge S_kv), switch to a
    # kv-tiled online-softmax variant instead of this fallback.
    return candidates[-1] if candidates else s_q


def cross_attention(x, context, params, *, n_heads: int):
    """x: (B, S_q, d_embed); context: (B, S_kv, d_cross)."""
    B, S_q, d_embed = x.shape
    _, S_kv, d_cross = context.shape
    assert d_embed % n_heads == 0
    d_head = d_embed // n_heads
    scale = 1.0 / math.sqrt(d_head)
    out_dtype = x.dtype
    out_bytes = x.dtype.itemsize

    # bf16 matmul operands; f32 accumulation happens inside the kernel.
    xb = x.astype(jnp.bfloat16)
    ctxb = context.astype(jnp.bfloat16)
    wq_t = (params['wq'].T * scale).astype(jnp.bfloat16)   # (d_embed, d_embed), scale folded
    wk_t = params['wk'].T.astype(jnp.bfloat16)             # (d_cross, d_embed)
    wv_t = params['wv'].T.astype(jnp.bfloat16)             # (d_cross, d_embed)
    wo_t = params['wo'].T.astype(jnp.bfloat16)             # (d_embed, d_embed)
    bq = (params['bq'] * scale).reshape(1, d_embed).astype(jnp.float32)
    bk = params['bk'].reshape(1, d_embed).astype(jnp.float32)
    bv = params['bv'].reshape(1, d_embed).astype(jnp.float32)

    # Generation-aware VMEM plan (v7x: 64 MiB, v5e/v6e: 128 MiB).
    vmem_cap = _vmem_capacity_bytes()
    vmem_limit = max(min(int(vmem_cap * 0.8), 100 * 1024 * 1024), 32 * 1024 * 1024)
    tq = _pick_q_tile(S_q, S_kv, d_embed, d_cross, n_heads, out_bytes,
                      budget=int(vmem_limit * 0.85))
    n_q_tiles = S_q // tq

    exp_dtype = _softmax_exp_dtype()
    kernel = _make_cross_attention_kernel(n_heads, d_embed, exp_dtype)

    def _resident(shape):
        # Grid-invariant operand: constant index_map, so one VMEM buffer is
        # enough (halves weight VMEM vs. default double-buffering).
        return pl.BlockSpec(shape, lambda b, qi: (0,) * len(shape),
                            pipeline_mode=pl.Buffered(1))

    return pl.pallas_call(
        kernel,
        out_shape=jax.ShapeDtypeStruct((B, S_q, d_embed), out_dtype),
        grid_spec=pltpu.PrefetchScalarGridSpec(
            num_scalar_prefetch=0,
            grid=(B, n_q_tiles),
            in_specs=[
                pl.BlockSpec((1, tq, d_embed), lambda b, qi: (b, qi, 0)),
                # Context changes only at batch boundaries; keep default double
                # buffering so the next batch's context prefetches under the
                # tail q tiles of the current one.
                pl.BlockSpec((1, S_kv, d_cross), lambda b, qi: (b, 0, 0)),
                _resident(wq_t.shape), _resident(bq.shape),
                _resident(wk_t.shape), _resident(bk.shape),
                _resident(wv_t.shape), _resident(bv.shape),
                _resident(wo_t.shape),
            ],
            out_specs=pl.BlockSpec((1, tq, d_embed), lambda b, qi: (b, qi, 0)),
            scratch_shapes=[
                pltpu.VMEM((n_heads, S_kv, d_head), jnp.bfloat16),  # cached K (head-major)
                pltpu.VMEM((n_heads, S_kv, d_head), jnp.bfloat16),  # cached V (head-major)
                pltpu.VMEM((n_heads, tq, d_head), jnp.bfloat16),    # per-tile q staging
                pltpu.VMEM((tq, d_embed), jnp.bfloat16),            # head-concat staging
            ],
        ),
        compiler_params=pltpu.CompilerParams(
            # qi must stay "arbitrary": the K/V scratch cache is filled at
            # qi == 0 and reused by later q tiles of the same batch element.
            dimension_semantics=("parallel", "arbitrary"),
            vmem_limit_bytes=vmem_limit,
        ),
    )(xb, ctxb, wq_t, bq, wk_t, bk, wv_t, bv, wo_t)


def cross_attention_ref(x, context, params, *, n_heads: int):
    """Pure-JAX f32 reference mirroring the (intended) PyTorch forward."""
    B, S_q, d_embed = x.shape
    d_head = d_embed // n_heads
    q = x @ params['wq'].T + params['bq']
    k = context @ params['wk'].T + params['bk']
    v = context @ params['wv'].T + params['bv']
    q = q.reshape(B, -1, n_heads, d_head).transpose(0, 2, 1, 3)
    k = k.reshape(B, -1, n_heads, d_head).transpose(0, 2, 1, 3)
    v = v.reshape(B, -1, n_heads, d_head).transpose(0, 2, 1, 3)
    w = jnp.einsum('bhqd,bhkd->bhqk', q, k) / math.sqrt(d_head)
    w = jax.nn.softmax(w, axis=-1)
    o = jnp.einsum('bhqk,bhkd->bhqd', w, v)
    o = o.transpose(0, 2, 1, 3).reshape(B, S_q, d_embed)
    return o @ params['wo'].T


if __name__ == "__main__":
    # Small shapes consistent with the module's forward.
    B, S_q, S_kv = 2, 8, 16
    d_embed, d_cross, n_heads = 32, 16, 4

    key = jax.random.PRNGKey(0)
    keys = jax.random.split(key, 10)
    params = {
        'wq': 0.05 * jax.random.normal(keys[0], (d_embed, d_embed), jnp.float32),
        'bq': 0.05 * jax.random.normal(keys[1], (d_embed,), jnp.float32),
        'wk': 0.05 * jax.random.normal(keys[2], (d_embed, d_cross), jnp.float32),
        'bk': 0.05 * jax.random.normal(keys[3], (d_embed,), jnp.float32),
        'wv': 0.05 * jax.random.normal(keys[4], (d_embed, d_cross), jnp.float32),
        'bv': 0.05 * jax.random.normal(keys[5], (d_embed,), jnp.float32),
        'wo': 0.05 * jax.random.normal(keys[6], (d_embed, d_embed), jnp.float32),
    }
    x = jax.random.normal(keys[7], (B, S_q, d_embed), jnp.float32)
    context = jax.random.normal(keys[8], (B, S_kv, d_cross), jnp.float32)

    out = cross_attention(x, context, params, n_heads=n_heads)
    out = jax.block_until_ready(out)

    ref = cross_attention_ref(x, context, params, n_heads=n_heads)
    assert out.shape == (B, S_q, d_embed)
    # bf16 MXU path (+ optional bf16 exp, approx reciprocal) vs f32 reference.
    assert jnp.allclose(out, ref, atol=2e-2, rtol=2e-2), "mismatch vs reference"

    print("KERNEL_OK")
</pallas_src>

<mosaic_0001>
module attributes {stable_mosaic.version = 11 : i64} {
  func.func @kernel(%arg0: i32, %arg1: i32, %arg2: memref<1x8x32xbf16, #tpu.memory_space<vmem>>, %arg3: memref<1x16x16xbf16, #tpu.memory_space<vmem>>, %arg4: memref<32x32xbf16, #tpu.memory_space<vmem>>, %arg5: memref<1x32xf32, #tpu.memory_space<vmem>>, %arg6: memref<16x32xbf16, #tpu.memory_space<vmem>>, %arg7: memref<1x32xf32, #tpu.memory_space<vmem>>, %arg8: memref<16x32xbf16, #tpu.memory_space<vmem>>, %arg9: memref<1x32xf32, #tpu.memory_space<vmem>>, %arg10: memref<32x32xbf16, #tpu.memory_space<vmem>>, %arg11: memref<1x8x32xf32, #tpu.memory_space<vmem>>, %arg12: memref<4x16x8xbf16, #tpu.memory_space<vmem>>, %arg13: memref<4x16x8xbf16, #tpu.memory_space<vmem>>, %arg14: memref<4x8x8xbf16, #tpu.memory_space<vmem>>, %arg15: memref<8x32xbf16, #tpu.memory_space<vmem>>) attributes {dimension_semantics = [#tpu.dimension_semantics<parallel>, #tpu.dimension_semantics<arbitrary>], iteration_bounds = array<i64: 2, 1>, scalar_prefetch = 0 : i64, scratch_operands = 4 : i64, tpu.core_type = #tpu.core_type<tc>, window_params = [{transform_indices = @transform_0, window_bounds = array<i64: 1, 8, 32>}, {transform_indices = @transform_1, window_bounds = array<i64: 1, 16, 16>}, {pipeline_mode = #tpu.pipeline_mode<synchronous>, transform_indices = @transform_2, window_bounds = array<i64: 32, 32>}, {pipeline_mode = #tpu.pipeline_mode<synchronous>, transform_indices = @transform_3, window_bounds = array<i64: 1, 32>}, {pipeline_mode = #tpu.pipeline_mode<synchronous>, transform_indices = @transform_4, window_bounds = array<i64: 16, 32>}, {pipeline_mode = #tpu.pipeline_mode<synchronous>, transform_indices = @transform_5, window_bounds = array<i64: 1, 32>}, {pipeline_mode = #tpu.pipeline_mode<synchronous>, transform_indices = @transform_6, window_bounds = array<i64: 16, 32>}, {pipeline_mode = #tpu.pipeline_mode<synchronous>, transform_indices = @transform_7, window_bounds = array<i64: 1, 32>}, {pipeline_mode = #tpu.pipeline_mode<synchronous>, transform_indices = @transform_8, window_bounds = array<i64: 32, 32>}, {transform_indices = @transform_9, window_bounds = array<i64: 1, 8, 32>}]} {
    %c0_i32 = arith.constant 0 : i32
    %0 = arith.cmpi eq, %arg1, %c0_i32 : i32
    %1 = arith.extui %0 : i1 to i32
    %c0_i32_0 = arith.constant 0 : i32
    %2 = arith.cmpi ne, %1, %c0_i32_0 : i32
    scf.if %2 {
      %c0_42 = arith.constant 0 : index
      %c0_43 = arith.constant 0 : index
      %c0_44 = arith.constant 0 : index
      %63 = vector.load %arg3[%c0_42, %c0_43, %c0_44] : memref<1x16x16xbf16, #tpu.memory_space<vmem>>, vector<1x16x16xbf16>
      %64 = vector.shape_cast %63 : vector<1x16x16xbf16> to vector<16x16xbf16>
      %c0_45 = arith.constant 0 : index
      %c0_46 = arith.constant 0 : index
      %65 = vector.load %arg6[%c0_45, %c0_46] : memref<16x32xbf16, #tpu.memory_space<vmem>>, vector<16x32xbf16>
      %cst_47 = arith.constant dense<0.000000e+00> : vector<16x32xf32>
      %66 = tpu.matmul %64, %65, %cst_47 {dimension_numbers = #tpu.dot_dimension_numbers<[1], [0], [0], [1], [0, 0, 1, 1], [], []>} : vector<16x16xbf16>, vector<16x32xbf16>, vector<16x32xf32> -> vector<16x32xf32>
      %c0_48 = arith.constant 0 : index
      %c0_49 = arith.constant 0 : index
      %67 = vector.load %arg7[%c0_48, %c0_49] : memref<1x32xf32, #tpu.memory_space<vmem>>, vector<1x32xf32>
      %68 = vector.broadcast %67 : vector<1x32xf32> to vector<16x32xf32>
      %69 = arith.addf %66, %68 : vector<16x32xf32>
      %c0_50 = arith.constant 0 : index
      %c0_51 = arith.constant 0 : index
      %70 = vector.load %arg8[%c0_50, %c0_51] : memref<16x32xbf16, #tpu.memory_space<vmem>>, vector<16x32xbf16>
      %cst_52 = arith.constant dense<0.000000e+00> : vector<16x32xf32>
      %71 = tpu.matmul %64, %70, %cst_52 {dimension_numbers = #tpu.dot_dimension_numbers<[1], [0], [0], [1], [0, 0, 1, 1], [], []>} : vector<16x16xbf16>, vector<16x32xbf16>, vector<16x32xf32> -> vector<16x32xf32>
      %c0_53 = arith.constant 0 : index
      %c0_54 = arith.constant 0 : index
      %72 = vector.load %arg9[%c0_53, %c0_54] : memref<1x32xf32, #tpu.memory_space<vmem>>, vector<1x32xf32>
      %73 = vector.broadcast %72 : vector<1x32xf32> to vector<16x32xf32>
      %74 = arith.addf %71, %73 : vector<16x32xf32>
      %75 = arith.truncf %69 : vector<16x32xf32> to vector<16x32xbf16>
      %76 = arith.truncf %74 : vector<16x32xf32> to vector<16x32xbf16>
      %77 = vector.extract_strided_slice %75 {offsets = [0, 0], sizes = [16, 8], strides = [1, 1]} : vector<16x32xbf16> to vector<16x8xbf16>
      %c0_55 = arith.constant 0 : index
      %c0_56 = arith.constant 0 : index
      %c0_57 = arith.constant 0 : index
      %78 = vector.load %arg12[%c0_55, %c0_56, %c0_57] : memref<4x16x8xbf16, #tpu.memory_space<vmem>>, vector<1x16x8xbf16>
      %79 = vector.shape_cast %78 : vector<1x16x8xbf16> to vector<16x8xbf16>
      %80 = vector.shape_cast %77 : vector<16x8xbf16> to vector<1x16x8xbf16>
      tpu.vector_store %arg12[%c0_55, %c0_56, %c0_57], %80 {strides = array<i32>} : memref<4x16x8xbf16, #tpu.memory_space<vmem>>, vector<1x16x8xbf16>,
      %81 = vector.extract_strided_slice %76 {offsets = [0, 0], sizes = [16, 8], strides = [1, 1]} : vector<16x32xbf16> to vector<16x8xbf16>
      %c0_58 = arith.constant 0 : index
      %c0_59 = arith.constant 0 : index
      %c0_60 = arith.constant 0 : index
      %82 = vector.load %arg13[%c0_58, %c0_59, %c0_60] : memref<4x16x8xbf16, #tpu.memory_space<vmem>>, vector<1x16x8xbf16>
      %83 = vector.shape_cast %82 : vector<1x16x8xbf16> to vector<16x8xbf16>
      %84 = vector.shape_cast %81 : vector<16x8xbf16> to vector<1x16x8xbf16>
      tpu.vector_store %arg13[%c0_58, %c0_59, %c0_60], %84 {strides = array<i32>} : memref<4x16x8xbf16, #tpu.memory_space<vmem>>, vector<1x16x8xbf16>,
      %85 = vector.extract_strided_slice %75 {offsets = [0, 8], sizes = [16, 8], strides = [1, 1]} : vector<16x32xbf16> to vector<16x8xbf16>
      %c1_61 = arith.constant 1 : index
      %c0_62 = arith.constant 0 : index
      %c0_63 = arith.constant 0 : index
      %86 = vector.load %arg12[%c1_61, %c0_62, %c0_63] : memref<4x16x8xbf16, #tpu.memory_space<vmem>>, vector<1x16x8xbf16>
      %87 = vector.shape_cast %86 : vector<1x16x8xbf16> to vector<16x8xbf16>
      %88 = vector.shape_cast %85 : vector<16x8xbf16> to vector<1x16x8xbf16>
      tpu.vector_store %arg12[%c1_61, %c0_62, %c0_63], %88 {strides = array<i32>} : memref<4x16x8xbf16, #tpu.memory_space<vmem>>, vector<1x16x8xbf16>,
      %89 = vector.extract_strided_slice %76 {offsets = [0, 8], sizes = [16, 8], strides = [1, 1]} : vector<16x32xbf16> to vector<16x8xbf16>
      %c1_64 = arith.constant 1 : index
      %c0_65 = arith.constant 0 : index
      %c0_66 = arith.constant 0 : index
      %90 = vector.load %arg13[%c1_64, %c0_65, %c0_66] : memref<4x16x8xbf16, #tpu.memory_space<vmem>>, vector<1x16x8xbf16>
      %91 = vector.shape_cast %90 : vector<1x16x8xbf16> to vector<16x8xbf16>
      %92 = vector.shape_cast %89 : vector<16x8xbf16> to vector<1x16x8xbf16>
      tpu.vector_store %arg13[%c1_64, %c0_65, %c0_66], %92 {strides = array<i32>} : memref<4x16x8xbf16, #tpu.memory_space<vmem>>, vector<1x16x8xbf16>,
      %93 = vector.extract_strided_slice %75 {offsets = [0, 16], sizes = [16, 8], strides = [1, 1]} : vector<16x32xbf16> to vector<16x8xbf16>
      %c2_67 = arith.constant 2 : index
      %c0_68 = arith.constant 0 : index
      %c0_69 = arith.constant 0 : index
      %94 = vector.load %arg12[%c2_67, %c0_68, %c0_69] : memref<4x16x8xbf16, #tpu.memory_space<vmem>>, vector<1x16x8xbf16>
      %95 = vector.shape_cast %94 : vector<1x16x8xbf16> to vector<16x8xbf16>
      %96 = vector.shape_cast %93 : vector<16x8xbf16> to vector<1x16x8xbf16>
      tpu.vector_store %arg12[%c2_67, %c0_68, %c0_69], %96 {strides = array<i32>} : memref<4x16x8xbf16, #tpu.memory_space<vmem>>, vector<1x16x8xbf16>,
      %97 = vector.extract_strided_slice %76 {offsets = [0, 16], sizes = [16, 8], strides = [1, 1]} : vector<16x32xbf16> to vector<16x8xbf16>
      %c2_70 = arith.constant 2 : index
      %c0_71 = arith.constant 0 : index
      %c0_72 = arith.constant 0 : index
      %98 = vector.load %arg13[%c2_70, %c0_71, %c0_72] : memref<4x16x8xbf16, #tpu.memory_space<vmem>>, vector<1x16x8xbf16>
      %99 = vector.shape_cast %98 : vector<1x16x8xbf16> to vector<16x8xbf16>
      %100 = vector.shape_cast %97 : vector<16x8xbf16> to vector<1x16x8xbf16>
      tpu.vector_store %arg13[%c2_70, %c0_71, %c0_72], %100 {strides = array<i32>} : memref<4x16x8xbf16, #tpu.memory_space<vmem>>, vector<1x16x8xbf16>,
      %101 = vector.extract_strided_slice %75 {offsets = [0, 24], sizes = [16, 8], strides = [1, 1]} : vector<16x32xbf16> to vector<16x8xbf16>
      %c3_73 = arith.constant 3 : index
      %c0_74 = arith.constant 0 : index
      %c0_75 = arith.constant 0 : index
      %102 = vector.load %arg12[%c3_73, %c0_74, %c0_75] : memref<4x16x8xbf16, #tpu.memory_space<vmem>>, vector<1x16x8xbf16>
      %103 = vector.shape_cast %102 : vector<1x16x8xbf16> to vector<16x8xbf16>
      %104 = vector.shape_cast %101 : vector<16x8xbf16> to vector<1x16x8xbf16>
      tpu.vector_store %arg12[%c3_73, %c0_74, %c0_75], %104 {strides = array<i32>} : memref<4x16x8xbf16, #tpu.memory_space<vmem>>, vector<1x16x8xbf16>,
      %105 = vector.extract_strided_slice %76 {offsets = [0, 24], sizes = [16, 8], strides = [1, 1]} : vector<16x32xbf16> to vector<16x8xbf16>
      %c3_76 = arith.constant 3 : index
      %c0_77 = arith.constant 0 : index
      %c0_78 = arith.constant 0 : index
      %106 = vector.load %arg13[%c3_76, %c0_77, %c0_78] : memref<4x16x8xbf16, #tpu.memory_space<vmem>>, vector<1x16x8xbf16>
      %107 = vector.shape_cast %106 : vector<1x16x8xbf16> to vector<16x8xbf16>
      %108 = vector.shape_cast %105 : vector<16x8xbf16> to vector<1x16x8xbf16>
      tpu.vector_store %arg13[%c3_76, %c0_77, %c0_78], %108 {strides = array<i32>} : memref<4x16x8xbf16, #tpu.memory_space<vmem>>, vector<1x16x8xbf16>,
    } else {
    }
    %c0 = arith.constant 0 : index
    %c0_1 = arith.constant 0 : index
    %c0_2 = arith.constant 0 : index
    %3 = vector.load %arg2[%c0, %c0_1, %c0_2] : memref<1x8x32xbf16, #tpu.memory_space<vmem>>, vector<1x8x32xbf16>
    %4 = vector.shape_cast %3 : vector<1x8x32xbf16> to vector<8x32xbf16>
    %c0_3 = arith.constant 0 : index
    %c0_4 = arith.constant 0 : index
    %5 = vector.load %arg4[%c0_3, %c0_4] : memref<32x32xbf16, #tpu.memory_space<vmem>>, vector<32x32xbf16>
    %cst = arith.constant dense<0.000000e+00> : vector<8x32xf32>
    %6 = tpu.matmul %4, %5, %cst {dimension_numbers = #tpu.dot_dimension_numbers<[1], [0], [0], [1], [0, 0, 1, 1], [], []>} : vector<8x32xbf16>, vector<32x32xbf16>, vector<8x32xf32> -> vector<8x32xf32>
    %c0_5 = arith.constant 0 : index
    %c0_6 = arith.constant 0 : index
    %7 = vector.load %arg5[%c0_5, %c0_6] : memref<1x32xf32, #tpu.memory_space<vmem>>, vector<1x32xf32>
    %8 = vector.broadcast %7 : vector<1x32xf32> to vector<8x32xf32>
    %9 = arith.addf %6, %8 : vector<8x32xf32>
    %10 = arith.truncf %9 : vector<8x32xf32> to vector<8x32xbf16>
    %11 = vector.extract_strided_slice %10 {offsets = [0, 0], sizes = [8, 8], strides = [1, 1]} : vector<8x32xbf16> to vector<8x8xbf16>
    %c0_7 = arith.constant 0 : index
    %c0_8 = arith.constant 0 : index
    %c0_9 = arith.constant 0 : index
    %12 = vector.load %arg14[%c0_7, %c0_8, %c0_9] : memref<4x8x8xbf16, #tpu.memory_space<vmem>>, vector<1x8x8xbf16>
    %13 = vector.shape_cast %12 : vector<1x8x8xbf16> to vector<8x8xbf16>
    %14 = vector.shape_cast %11 : vector<8x8xbf16> to vector<1x8x8xbf16>
    tpu.vector_store %arg14[%c0_7, %c0_8, %c0_9], %14 {strides = array<i32>} : memref<4x8x8xbf16, #tpu.memory_space<vmem>>, vector<1x8x8xbf16>,
    %15 = vector.extract_strided_slice %10 {offsets = [0, 8], sizes = [8, 8], strides = [1, 1]} : vector<8x32xbf16> to vector<8x8xbf16>
    %c1 = arith.constant 1 : index
    %c0_10 = arith.constant 0 : index
    %c0_11 = arith.constant 0 : index
    %16 = vector.load %arg14[%c1, %c0_10, %c0_11] : memref<4x8x8xbf16, #tpu.memory_space<vmem>>, vector<1x8x8xbf16>
    %17 = vector.shape_cast %16 : vector<1x8x8xbf16> to vector<8x8xbf16>
    %18 = vector.shape_cast %15 : vector<8x8xbf16> to vector<1x8x8xbf16>
    tpu.vector_store %arg14[%c1, %c0_10, %c0_11], %18 {strides = array<i32>} : memref<4x8x8xbf16, #tpu.memory_space<vmem>>, vector<1x8x8xbf16>,
    %19 = vector.extract_strided_slice %10 {offsets = [0, 16], sizes = [8, 8], strides = [1, 1]} : vector<8x32xbf16> to vector<8x8xbf16>
    %c2 = arith.constant 2 : index
    %c0_12 = arith.constant 0 : index
    %c0_13 = arith.constant 0 : index
    %20 = vector.load %arg14[%c2, %c0_12, %c0_13] : memref<4x8x8xbf16, #tpu.memory_space<vmem>>, vector<1x8x8xbf16>
    %21 = vector.shape_cast %20 : vector<1x8x8xbf16> to vector<8x8xbf16>
    %22 = vector.shape_cast %19 : vector<8x8xbf16> to vector<1x8x8xbf16>
    tpu.vector_store %arg14[%c2, %c0_12, %c0_13], %22 {strides = array<i32>} : memref<4x8x8xbf16, #tpu.memory_space<vmem>>, vector<1x8x8xbf16>,
    %23 = vector.extract_strided_slice %10 {offsets = [0, 24], sizes = [8, 8], strides = [1, 1]} : vector<8x32xbf16> to vector<8x8xbf16>
    %c3 = arith.constant 3 : index
    %c0_14 = arith.constant 0 : index
    %c0_15 = arith.constant 0 : index
    %24 = vector.load %arg14[%c3, %c0_14, %c0_15] : memref<4x8x8xbf16, #tpu.memory_space<vmem>>, vector<1x8x8xbf16>
    %25 = vector.shape_cast %24 : vector<1x8x8xbf16> to vector<8x8xbf16>
    %26 = vector.shape_cast %23 : vector<8x8xbf16> to vector<1x8x8xbf16>
    tpu.vector_store %arg14[%c3, %c0_14, %c0_15], %26 {strides = array<i32>} : memref<4x8x8xbf16, #tpu.memory_space<vmem>>, vector<1x8x8xbf16>,
    %c0_16 = arith.constant 0 : index
    %c0_17 = arith.constant 0 : index
    %c0_18 = arith.constant 0 : index
    %27 = vector.load %arg14[%c0_16, %c0_17, %c0_18] : memref<4x8x8xbf16, #tpu.memory_space<vmem>>, vector<4x8x8xbf16>
    %c0_19 = arith.constant 0 : index
    %c0_20 = arith.constant 0 : index
    %c0_21 = arith.constant 0 : index
    %28 = vector.load %arg12[%c0_19, %c0_20, %c0_21] : memref<4x16x8xbf16, #tpu.memory_space<vmem>>, vector<4x16x8xbf16>
    %c0_22 = arith.constant 0 : index
    %c0_23 = arith.constant 0 : index
    %c0_24 = arith.constant 0 : index
    %29 = vector.load %arg13[%c0_22, %c0_23, %c0_24] : memref<4x16x8xbf16, #tpu.memory_space<vmem>>, vector<4x16x8xbf16>
    "tpu.trace_start"() <{level = 10 : i32, message = "hqd,hkd->hqk"}> : () -> ()
    %cst_25 = arith.constant dense<0.000000e+00> : vector<4x8x16xf32>
    %30 = tpu.matmul %27, %28, %cst_25 {dimension_numbers = #tpu.dot_dimension_numbers<[2], [2], [1], [1], [0, 0, 0, 1, 1, 1], [0], [0]>} : vector<4x8x8xbf16>, vector<4x16x8xbf16>, vector<4x8x16xf32> -> vector<4x8x16xf32>
    "tpu.trace_stop"() : () -> ()
    %cst_26 = arith.constant dense<0xFF800000> : vector<4x8xf32>
    %31 = vector.multi_reduction <maximumf>, %30, %cst_26 [2] : vector<4x8x16xf32> to vector<4x8xf32>
    %32 = vector.shape_cast %31 : vector<4x8xf32> to vector<4x8x1xf32>
    %33 = vector.broadcast %32 : vector<4x8x1xf32> to vector<4x8x16xf32>
    %34 = arith.subf %30, %33 : vector<4x8x16xf32>
    %35 = arith.truncf %34 : vector<4x8x16xf32> to vector<4x8x16xbf16>
    %36 = math.exp %35 : vector<4x8x16xbf16>
    %37 = arith.extf %36 : vector<4x8x16xbf16> to vector<4x8x16xf32>
    %cst_27 = arith.constant dense<0.000000e+00> : vector<4x8xf32>
    %38 = vector.multi_reduction <add>, %37, %cst_27 [2] : vector<4x8x16xf32> to vector<4x8xf32>
    %39 = vector.shape_cast %38 : vector<4x8xf32> to vector<4x8x1xf32>
    "tpu.trace_start"() <{level = 10 : i32, message = "hqk,hkd->hqd"}> : () -> ()
    %cst_28 = arith.constant dense<0.000000e+00> : vector<4x8x8xf32>
    %40 = tpu.matmul %36, %29, %cst_28 {dimension_numbers = #tpu.dot_dimension_numbers<[2], [1], [1], [2], [0, 0, 0, 1, 1, 2], [0], [0]>} : vector<4x8x16xbf16>, vector<4x16x8xbf16>, vector<4x8x8xf32> -> vector<4x8x8xf32>
    "tpu.trace_stop"() : () -> ()
    %41 = tpu.reciprocal %39 {approx = true} : vector<4x8x1xf32> -> vector<4x8x1xf32>
    %42 = vector.broadcast %41 : vector<4x8x1xf32> to vector<4x8x8xf32>
    %43 = arith.mulf %40, %42 : vector<4x8x8xf32>
    %44 = arith.truncf %43 : vector<4x8x8xf32> to vector<4x8x8xbf16>
    %45 = vector.extract_strided_slice %44 {offsets = [0, 0, 0], sizes = [1, 8, 8], strides = [1, 1, 1]} : vector<4x8x8xbf16> to vector<1x8x8xbf16>
    %46 = vector.shape_cast %45 : vector<1x8x8xbf16> to vector<8x8xbf16>
    %c0_29 = arith.constant 0 : index
    %c0_30 = arith.constant 0 : index
    %47 = vector.load %arg15[%c0_29, %c0_30] : memref<8x32xbf16, #tpu.memory_space<vmem>>, vector<8x8xbf16>
    tpu.vector_store %arg15[%c0_29, %c0_30], %46 {strides = array<i32>} : memref<8x32xbf16, #tpu.memory_space<vmem>>, vector<8x8xbf16>,
    %48 = vector.extract_strided_slice %44 {offsets = [1, 0, 0], sizes = [1, 8, 8], strides = [1, 1, 1]} : vector<4x8x8xbf16> to vector<1x8x8xbf16>
    %49 = vector.shape_cast %48 : vector<1x8x8xbf16> to vector<8x8xbf16>
    %c0_31 = arith.constant 0 : index
    %c8 = arith.constant 8 : index
    %50 = vector.load %arg15[%c0_31, %c8] : memref<8x32xbf16, #tpu.memory_space<vmem>>, vector<8x8xbf16>
    tpu.vector_store %arg15[%c0_31, %c8], %49 {strides = array<i32>} : memref<8x32xbf16, #tpu.memory_space<vmem>>, vector<8x8xbf16>,
    %51 = vector.extract_strided_slice %44 {offsets = [2, 0, 0], sizes = [1, 8, 8], strides = [1, 1, 1]} : vector<4x8x8xbf16> to vector<1x8x8xbf16>
    %52 = vector.shape_cast %51 : vector<1x8x8xbf16> to vector<8x8xbf16>
    %c0_32 = arith.constant 0 : index
    %c16 = arith.constant 16 : index
    %53 = vector.load %arg15[%c0_32, %c16] : memref<8x32xbf16, #tpu.memory_space<vmem>>, vector<8x8xbf16>
    tpu.vector_store %arg15[%c0_32, %c16], %52 {strides = array<i32>} : memref<8x32xbf16, #tpu.memory_space<vmem>>, vector<8x8xbf16>,
    %54 = vector.extract_strided_slice %44 {offsets = [3, 0, 0], sizes = [1, 8, 8], strides = [1, 1, 1]} : vector<4x8x8xbf16> to vector<1x8x8xbf16>
    %55 = vector.shape_cast %54 : vector<1x8x8xbf16> to vector<8x8xbf16>
    %c0_33 = arith.constant 0 : index
    %c24 = arith.constant 24 : index
    %56 = vector.load %arg15[%c0_33, %c24] : memref<8x32xbf16, #tpu.memory_space<vmem>>, vector<8x8xbf16>
    tpu.vector_store %arg15[%c0_33, %c24], %55 {strides = array<i32>} : memref<8x32xbf16, #tpu.memory_space<vmem>>, vector<8x8xbf16>,
    %c0_34 = arith.constant 0 : index
    %c0_35 = arith.constant 0 : index
    %57 = vector.load %arg15[%c0_34, %c0_35] : memref<8x32xbf16, #tpu.memory_space<vmem>>, vector<8x32xbf16>
    %c0_36 = arith.constant 0 : index
    %c0_37 = arith.constant 0 : index
    %58 = vector.load %arg10[%c0_36, %c0_37] : memref<32x32xbf16, #tpu.memory_space<vmem>>, vector<32x32xbf16>
    %cst_38 = arith.constant dense<0.000000e+00> : vector<8x32xf32>
    %59 = tpu.matmul %57, %58, %cst_38 {dimension_numbers = #tpu.dot_dimension_numbers<[1], [0], [0], [1], [0, 0, 1, 1], [], []>} : vector<8x32xbf16>, vector<32x32xbf16>, vector<8x32xf32> -> vector<8x32xf32>
    %c0_39 = arith.constant 0 : index
    %c0_40 = arith.constant 0 : index
    %c0_41 = arith.constant 0 : index
    %60 = vector.load %arg11[%c0_39, %c0_40, %c0_41] : memref<1x8x32xf32, #tpu.memory_space<vmem>>, vector<1x8x32xf32>
    %61 = vector.shape_cast %60 : vector<1x8x32xf32> to vector<8x32xf32>
    %62 = vector.shape_cast %59 : vector<8x32xf32> to vector<1x8x32xf32>
    tpu.vector_store %arg11[%c0_39, %c0_40, %c0_41], %62 {strides = array<i32>} : memref<1x8x32xf32, #tpu.memory_space<vmem>>, vector<1x8x32xf32>,
    return
  }
  func.func @transform_0(%arg0: i32, %arg1: i32) -> (i32, i32, i32) {
    %c0_i32 = arith.constant 0 : i32
    %c0_i32_0 = arith.constant 0 : i32
    return %arg0, %arg1, %c0_i32 : i32, i32, i32
  }
  func.func @transform_1(%arg0: i32, %arg1: i32) -> (i32, i32, i32) {
    %c0_i32 = arith.constant 0 : i32
    %c0_i32_0 = arith.constant 0 : i32
    %c0_i32_1 = arith.constant 0 : i32
    return %arg0, %c0_i32, %c0_i32_0 : i32, i32, i32
  }
  func.func @transform_2(%arg0: i32, %arg1: i32) -> (i32, i32) {
    %c0_i32 = arith.constant 0 : i32
    %c0_i32_0 = arith.constant 0 : i32
    %c0_i32_1 = arith.constant 0 : i32
    return %c0_i32, %c0_i32_0 : i32, i32
  }
  func.func @transform_3(%arg0: i32, %arg1: i32) -> (i32, i32) {
    %c0_i32 = arith.constant 0 : i32
    %c0_i32_0 = arith.constant 0 : i32
    %c0_i32_1 = arith.constant 0 : i32
    return %c0_i32, %c0_i32_0 : i32, i32
  }
  func.func @transform_4(%arg0: i32, %arg1: i32) -> (i32, i32) {
    %c0_i32 = arith.constant 0 : i32
    %c0_i32_0 = arith.constant 0 : i32
    %c0_i32_1 = arith.constant 0 : i32
    return %c0_i32, %c0_i32_0 : i32, i32
  }
  func.func @transform_5(%arg0: i32, %arg1: i32) -> (i32, i32) {
    %c0_i32 = arith.constant 0 : i32
    %c0_i32_0 = arith.constant 0 : i32
    %c0_i32_1 = arith.constant 0 : i32
    return %c0_i32, %c0_i32_0 : i32, i32
  }
  func.func @transform_6(%arg0: i32, %arg1: i32) -> (i32, i32) {
    %c0_i32 = arith.constant 0 : i32
    %c0_i32_0 = arith.constant 0 : i32
    %c0_i32_1 = arith.constant 0 : i32
    return %c0_i32, %c0_i32_0 : i32, i32
  }
  func.func @transform_7(%arg0: i32, %arg1: i32) -> (i32, i32) {
    %c0_i32 = arith.constant 0 : i32
    %c0_i32_0 = arith.constant 0 : i32
    %c0_i32_1 = arith.constant 0 : i32
    return %c0_i32, %c0_i32_0 : i32, i32
  }
  func.func @transform_8(%arg0: i32, %arg1: i32) -> (i32, i32) {
    %c0_i32 = arith.constant 0 : i32
    %c0_i32_0 = arith.constant 0 : i32
    %c0_i32_1 = arith.constant 0 : i32
    return %c0_i32, %c0_i32_0 : i32, i32
  }
  func.func @transform_9(%arg0: i32, %arg1: i32) -> (i32, i32, i32) {
    %c0_i32 = arith.constant 0 : i32
    %c0_i32_0 = arith.constant 0 : i32
    return %arg0, %arg1, %c0_i32 : i32, i32, i32
  }
}

</mosaic_0001>

<llo_original>
// kernel: tpu_custom_call.1
$region0: #{tpu_custom_call.1}
  #allocation0 [shape = 'u32[]', space=smem, size = 0x4, offset = 0x4, fixed_abs, tag = 'smem constant byte address 0x4 - core index']
  #allocation1 [shape = 'u32[144,128]{1,0:T(1,128)}', space=vmem, size = 0x12000, scoped, tag = 'internal scratch']
  #allocation2 [shape = 'bf16[4,16,8]{2,1,0:T(16,128)(2,1)}', space=vmem, size = 0x4000, scoped, tag = 'scratch operand']
  #allocation3 [shape = 'bf16[4,16,8]{2,1,0:T(16,128)(2,1)}', space=vmem, size = 0x4000, scoped, tag = 'scratch operand']
  #allocation4 [shape = 'bf16[4,8,8]{2,1,0:T(8,128)(2,1)}', space=vmem, size = 0x2000, scoped, tag = 'scratch operand']
  #allocation5 [shape = 'bf16[8,32]{1,0:T(8,128)(2,1)}', space=vmem, size = 0x800, scoped, tag = 'scratch operand']
  %s0 = inlined_call_operand.hbm [shape: bf16[2,8,32], index: 0, kind: input, shape index: {}]
  %s1 = inlined_call_operand.hbm [shape: bf16[2,16,16], index: 1, kind: input, shape index: {}]
  %s2 = inlined_call_operand.hbm [shape: bf16[32,32], index: 2, kind: input, shape index: {}]
  %s3 = inlined_call_operand.vmem [shape: f32[1,32], index: 3, kind: input, shape index: {}]
  %s4 = inlined_call_operand.vmem [shape: bf16[16,32], index: 4, kind: input, shape index: {}]
  %s5 = inlined_call_operand.vmem [shape: f32[1,32], index: 5, kind: input, shape index: {}]
  %s6 = inlined_call_operand.hbm [shape: bf16[16,32], index: 6, kind: input, shape index: {}]
  %s7 = inlined_call_operand.vmem [shape: f32[1,32], index: 7, kind: input, shape index: {}]
  %s8 = inlined_call_operand.vmem [shape: bf16[32,32], index: 8, kind: input, shape index: {}]
  %s9 = inlined_call_operand.hbm [shape: f32[2,8,32], index: 9, kind: output, shape index: {}]
  %s10 = sld [smem:[#allocation0]]
  $region89: #{tpu_custom_call.1} parent=0
    _
  %s12 = ssub.s32 1, %s10
  %s13 = scalar_select 0, %s12, %s10
  $region1: #{tpu_custom_call.1} parent=0
    #allocation6 [shape = 'u8[4096]{0}', space=vmem, size = 0x1000, scoped, tag = 'input window, operand 0']
    #allocation7 [shape = 's32[2]{0}', space=sflag, size = 0x8, scoped, tag = 'scoped memory for tpu_custom_call.1']
    #allocation8 [shape = 's32[2]{0}', space=sflag, size = 0x8, scoped, tag = 'scoped memory for tpu_custom_call.1']
    #allocation9 [shape = 'u8[8192]{0}', space=vmem, size = 0x2000, scoped, tag = 'input window, operand 1']
    #allocation10 [shape = 's32[2]{0}', space=sflag, size = 0x8, scoped, tag = 'scoped memory for tpu_custom_call.1']
    #allocation11 [shape = 'u8[8192]{0}', space=vmem, size = 0x2000, scoped, tag = 'input window, operand 2, single buffered']
    #allocation12 [shape = 'u8[4096]{0}', space=vmem, size = 0x1000, scoped, tag = 'input window, operand 6, single buffered']
    #allocation13 [shape = 's32[1]{0}', space=sflag, size = 0x4, scoped, tag = 'scoped memory for tpu_custom_call.1']
    #allocation14 [shape = 'u8[8192]{0}', space=vmem, size = 0x2000, scoped, tag = 'output window, operand 0']
    %14 = vsyncpa [#allocation7], 0
    %s15 = scalar_lea.sflag [#allocation7], 1
    %16 = vsyncpa %s15, 0
    %17 = vsyncpa [#allocation10], 0
    %s18 = scalar_lea.sflag [#allocation10], 1
    %19 = vsyncpa %s18, 0
    %20 = vsyncpa [#allocation13], 0
    %21 = vsyncpa [#allocation8], 0
    %s22 = scalar_lea.sflag [#allocation8], 1
    %23 = vsyncpa %s22, 0
    loop: start=0, step=1, limit=4
    $region2: #{tpu_custom_call.1} parent=1 // loop_pre_header
      _
    $region3: #{tpu_custom_call.1} parent=1 // loop_header
      %s25 = sphi 0, %s29
      %p26 = scmp.ge.s32.totalorder %s25, 4
      %s32 = sphi 0, %s44
      %s33 = sphi 0, %s40
      %s34 = sphi 0, %s32
      %s35 = sphi 0, %s33
      %s36 = sphi 0, %s34
      %s37 = sphi 0, %s35
      %s49 = sphi 0, %s51
      %s52 = sphi 0, %s49
      %s53 = sphi 0, %s52
      %s69 = sphi 0, %s53
      %s75 = sphi 0, %s77
      %s78 = sphi 0, %s75
      %s79 = sphi 0, %s78
      %s95 = sphi 0, %s79
      %s99 = sphi 0, %s99
      %s101 = sphi 0, %s99
      %s102 = sphi 0, %s101
      %s116 = sphi 0, %s102
      %s120 = sphi 0, %s120
      %s122 = sphi 0, %s120
      %s123 = sphi 0, %s122
      %s137 = sphi 0, %s123
      %s141 = sphi 0, %s141
      %s143 = sphi 0, %s141
      %s144 = sphi 0, %s143
      %s158 = sphi 0, %s144
      %s162 = sphi 0, %s162
      %s164 = sphi 0, %s162
      %s165 = sphi 0, %s164
      %s179 = sphi 0, %s165
      %s183 = sphi 0, %s183
      %s185 = sphi 0, %s183
      %s186 = sphi 0, %s185
      %s200 = sphi 0, %s186
      %s204 = sphi 0, %s204
      %s206 = sphi 0, %s204
      %s207 = sphi 0, %s206
      %s221 = sphi 0, %s207
      %s225 = sphi 0, %s225
      %s227 = sphi 0, %s225
      %s228 = sphi 0, %s227
      %s242 = sphi 0, %s228
      %s250 = sphi 0, %s252
      %s253 = sphi 0, %s250
      %s254 = sphi 0, %s253
      %s270 = sphi 0, %s254
    $region4: #{tpu_custom_call.1} parent=1 // loop_header_branch
      %28 = sbr.rel (%p26) target = $region8
    $region5: #{tpu_custom_call.1} parent=1 // loop_body
      %s30 = ssub.s32 %s25, 1
      %s31 = ssub.s32 %s25, 2
      %s38 = sadd.s32 1, %s33
      %p39 = scmp.ge.s32.totalorder %s38, 1
      %s40 = scalar_select %p39, 0, %s38
      %s41 = sadd.s32 1, %s32
      %s42 = scalar_select %p39, %s41, %s32
      %p43 = scmp.ge.s32.totalorder %s42, 2
      %s44 = scalar_select %p43, 0, %s42
      %s45 = ssub.s32 %s32, %s44
      %s46 = ssub.s32 %s33, %s40
      %s47 = sor.u32 %s45, %s46
      %p48 = scmp.eq.s32.totalorder %s47, 0
      %s50 = sadd.s32 %s49, 1
      %s51 = scalar_select %p48, %s49, %s50
      %p54 = pneg %p48
      %p55 = scmp.eq.s32.totalorder %s25, 1
      %p56 = por %p54, %p55
      %p57 = scmp.ne.s32.totalorder %s49, %s52
      %p58 = scmp.eq.s32.totalorder %s25, 0
      %p59 = por %p57, %p58
      %p60 = scmp.ne.s32.totalorder %s49, %s52
      %p61 = scmp.eq.s32.totalorder %s30, 1
      %p62 = por %p60, %p61
      %p63 = scmp.ne.s32.totalorder %s52, %s53
      %p64 = scmp.eq.s32.totalorder %s30, 0
      %p65 = por %p63, %p64
      %p66 = scmp.ne.s32.totalorder %s52, %s53
      %p67 = scmp.eq.s32.totalorder %s31, 1
      %p68 = por %p66, %p67
      %p70 = scmp.ne.s32.totalorder %s53, %s69
      %p71 = scmp.eq.s32.totalorder %s31, 0
      %p72 = por %p70, %p71
      %s73 = ssub.s32 %s32, %s44
      %p74 = scmp.eq.s32.totalorder %s73, 0
      %s76 = sadd.s32 %s75, 1
      %s77 = scalar_select %p74, %s75, %s76
      %p80 = pneg %p74
      %p81 = scmp.eq.s32.totalorder %s25, 1
      %p82 = por %p80, %p81
      %p83 = scmp.ne.s32.totalorder %s75, %s78
      %p84 = scmp.eq.s32.totalorder %s25, 0
      %p85 = por %p83, %p84
      %p86 = scmp.ne.s32.totalorder %s75, %s78
      %p87 = scmp.eq.s32.totalorder %s30, 1
      %p88 = por %p86, %p87
      %p89 = scmp.ne.s32.totalorder %s78, %s79
      %p90 = scmp.eq.s32.totalorder %s30, 0
      %p91 = por %p89, %p90
      %p92 = scmp.ne.s32.totalorder %s78, %s79
      %p93 = scmp.eq.s32.totalorder %s31, 1
      %p94 = por %p92, %p93
      %p96 = scmp.ne.s32.totalorder %s79, %s95
      %p97 = scmp.eq.s32.totalorder %s31, 0
      %p98 = por %p96, %p97
      %s100 = sadd.s32 %s99, 1
      %p103 = scmp.eq.s32.totalorder %s25, 1
      %p104 = scmp.ne.s32.totalorder %s99, %s101
      %p105 = scmp.eq.s32.totalorder %s25, 0
      %p106 = por %p104, %p105
      %p107 = scmp.ne.s32.totalorder %s99, %s101
      %p108 = scmp.eq.s32.totalorder %s30, 1
      %p109 = por %p107, %p108
      %p110 = scmp.ne.s32.totalorder %s101, %s102
      %p111 = scmp.eq.s32.totalorder %s30, 0
      %p112 = por %p110, %p111
      %p113 = scmp.ne.s32.totalorder %s101, %s102
      %p114 = scmp.eq.s32.totalorder %s31, 1
      %p115 = por %p113, %p114
      %p117 = scmp.ne.s32.totalorder %s102, %s116
      %p118 = scmp.eq.s32.totalorder %s31, 0
      %p119 = por %p117, %p118
      %s121 = sadd.s32 %s120, 1
      %p124 = scmp.eq.s32.totalorder %s25, 1
      %p125 = scmp.ne.s32.totalorder %s120, %s122
      %p126 = scmp.eq.s32.totalorder %s25, 0
      %p127 = por %p125, %p126
      %p128 = scmp.ne.s32.totalorder %s120, %s122
      %p129 = scmp.eq.s32.totalorder %s30, 1
      %p130 = por %p128, %p129
      %p131 = scmp.ne.s32.totalorder %s122, %s123
      %p132 = scmp.eq.s32.totalorder %s30, 0
      %p133 = por %p131, %p132
      %p134 = scmp.ne.s32.totalorder %s122, %s123
      %p135 = scmp.eq.s32.totalorder %s31, 1
      %p136 = por %p134, %p135
      %p138 = scmp.ne.s32.totalorder %s123, %s137
      %p139 = scmp.eq.s32.totalorder %s31, 0
      %p140 = por %p138, %p139
      %s142 = sadd.s32 %s141, 1
      %p145 = scmp.eq.s32.totalorder %s25, 1
      %p146 = scmp.ne.s32.totalorder %s141, %s143
      %p147 = scmp.eq.s32.totalorder %s25, 0
      %p148 = por %p146, %p147
      %p149 = scmp.ne.s32.totalorder %s141, %s143
      %p150 = scmp.eq.s32.totalorder %s30, 1
      %p151 = por %p149, %p150
      %p152 = scmp.ne.s32.totalorder %s143, %s144
      %p153 = scmp.eq.s32.totalorder %s30, 0
      %p154 = por %p152, %p153
      %p155 = scmp.ne.s32.totalorder %s143, %s144
      %p156 = scmp.eq.s32.totalorder %s31, 1
      %p157 = por %p155, %p156
      %p159 = scmp.ne.s32.totalorder %s144, %s158
      %p160 = scmp.eq.s32.totalorder %s31, 0
      %p161 = por %p159, %p160
      %s163 = sadd.s32 %s162, 1
      %p166 = scmp.eq.s32.totalorder %s25, 1
      %p167 = scmp.ne.s32.totalorder %s162, %s164
      %p168 = scmp.eq.s32.totalorder %s25, 0
      %p169 = por %p167, %p168
      %p170 = scmp.ne.s32.totalorder %s162, %s164
      %p171 = scmp.eq.s32.totalorder %s30, 1
      %p172 = por %p170, %p171
      %p173 = scmp.ne.s32.totalorder %s164, %s165
      %p174 = scmp.eq.s32.totalorder %s30, 0
      %p175 = por %p173, %p174
      %p176 = scmp.ne.s32.totalorder %s164, %s165
      %p177 = scmp.eq.s32.totalorder %s31, 1
      %p178 = por %p176, %p177
      %p180 = scmp.ne.s32.totalorder %s165, %s179
      %p181 = scmp.eq.s32.totalorder %s31, 0
      %p182 = por %p180, %p181
      %s184 = sadd.s32 %s183, 1
      %p187 = scmp.eq.s32.totalorder %s25, 1
      %p188 = scmp.ne.s32.totalorder %s183, %s185
      %p189 = scmp.eq.s32.totalorder %s25, 0
      %p190 = por %p188, %p189
      %p191 = scmp.ne.s32.totalorder %s183, %s185
      %p192 = scmp.eq.s32.totalorder %s30, 1
      %p193 = por %p191, %p192
      %p194 = scmp.ne.s32.totalorder %s185, %s186
      %p195 = scmp.eq.s32.totalorder %s30, 0
      %p196 = por %p194, %p195
      %p197 = scmp.ne.s32.totalorder %s185, %s186
      %p198 = scmp.eq.s32.totalorder %s31, 1
      %p199 = por %p197, %p198
      %p201 = scmp.ne.s32.totalorder %s186, %s200
      %p202 = scmp.eq.s32.totalorder %s31, 0
      %p203 = por %p201, %p202
      %s205 = sadd.s32 %s204, 1
      %p208 = scmp.eq.s32.totalorder %s25, 1
      %p209 = scmp.ne.s32.totalorder %s204, %s206
      %p210 = scmp.eq.s32.totalorder %s25, 0
      %p211 = por %p209, %p210
      %p212 = scmp.ne.s32.totalorder %s204, %s206
      %p213 = scmp.eq.s32.totalorder %s30, 1
      %p214 = por %p212, %p213
      %p215 = scmp.ne.s32.totalorder %s206, %s207
      %p216 = scmp.eq.s32.totalorder %s30, 0
      %p217 = por %p215, %p216
      %p218 = scmp.ne.s32.totalorder %s206, %s207
      %p219 = scmp.eq.s32.totalorder %s31, 1
      %p220 = por %p218, %p219
      %p222 = scmp.ne.s32.totalorder %s207, %s221
      %p223 = scmp.eq.s32.totalorder %s31, 0
      %p224 = por %p222, %p223
      %s226 = sadd.s32 %s225, 1
      %p229 = scmp.eq.s32.totalorder %s25, 1
      %p230 = scmp.ne.s32.totalorder %s225, %s227
      %p231 = scmp.eq.s32.totalorder %s25, 0
      %p232 = por %p230, %p231
      %p233 = scmp.ne.s32.totalorder %s225, %s227
      %p234 = scmp.eq.s32.totalorder %s30, 1
      %p235 = por %p233, %p234
      %p236 = scmp.ne.s32.totalorder %s227, %s228
      %p237 = scmp.eq.s32.totalorder %s30, 0
      %p238 = por %p236, %p237
      %p239 = scmp.ne.s32.totalorder %s227, %s228
      %p240 = scmp.eq.s32.totalorder %s31, 1
      %p241 = por %p239, %p240
      %p243 = scmp.ne.s32.totalorder %s228, %s242
      %p244 = scmp.eq.s32.totalorder %s31, 0
      %p245 = por %p243, %p244
      %s246 = ssub.s32 %s32, %s44
      %s247 = ssub.s32 %s33, %s40
      %s248 = sor.u32 %s246, %s247
      %p249 = scmp.eq.s32.totalorder %s248, 0
      %s251 = sadd.s32 %s250, 1
      %s252 = scalar_select %p249, %s250, %s251
      %p255 = pneg %p249
      %p256 = scmp.eq.s32.totalorder %s25, 1
      %p257 = por %p255, %p256
      %p258 = scmp.ne.s32.totalorder %s250, %s253
      %p259 = scmp.eq.s32.totalorder %s25, 0
      %p260 = por %p258, %p259
      %p261 = scmp.ne.s32.totalorder %s250, %s253
      %p262 = scmp.eq.s32.totalorder %s30, 1
      %p263 = por %p261, %p262
      %p264 = scmp.ne.s32.totalorder %s253, %s254
      %p265 = scmp.eq.s32.totalorder %s30, 0
      %p266 = por %p264, %p265
      %p267 = scmp.ne.s32.totalorder %s253, %s254
      %p268 = scmp.eq.s32.totalorder %s31, 1
      %p269 = por %p267, %p268
      %p271 = scmp.ne.s32.totalorder %s254, %s270
      %p272 = scmp.eq.s32.totalorder %s31, 0
      %p273 = por %p271, %p272
      %p274 = scmp.le.s32.totalorder 1, %s25
      %p275 = scmp.lt.s32.totalorder %s25, 3
      %p276 = pnand %p274, %p275
      %p277 = pneg %p276
      // Predicated region
      $region9: #{tpu_custom_call.1} parent=5 // pred_check
        _
      $region10: #{tpu_custom_call.1} parent=5 // pred_check_branch
        %279 = sbr.rel (%p276) target = $region12
      $region11: #{tpu_custom_call.1} parent=5 // pred_region
        %s280 = ssub.s32 %s25, 1
        // Predicated region
        $region13: #{tpu_custom_call.1} parent=11 // pred_check
          %p281 = pneg %p112
        $region14: #{tpu_custom_call.1} parent=11 // pred_check_branch
          %283 = sbr.rel (%p281) target = $region16
        $region15: #{tpu_custom_call.1} parent=11 // pred_region
          %s285 = ssub.s32 256, 256
          %286 = vsyncadd [#allocation10], %s285
          %s287 = sshll.u32 [#allocation11], 4
          %s288 = int_to_ptr.vmem [resolvable:$true] %s287
          %293 = dma.hbm_to_vmem [thread:$0]  %s2, 256, %s288, [#allocation10], 64, 64, 4
        $region16: #{tpu_custom_call.1} parent=11 // pred_fallthru
          _
        // Predicated region
        $region17: #{tpu_custom_call.1} parent=11 // pred_check
          %p294 = pneg %p133
        $region18: #{tpu_custom_call.1} parent=11 // pred_check_branch
          %296 = sbr.rel (%p294) target = $region20
        $region19: #{tpu_custom_call.1} parent=11 // pred_region
          _
        $region20: #{tpu_custom_call.1} parent=11 // pred_fallthru
          _
        // Predicated region
        $region21: #{tpu_custom_call.1} parent=11 // pred_check
          %p297 = pneg %p154
        $region22: #{tpu_custom_call.1} parent=11 // pred_check_branch
          %299 = sbr.rel (%p297) target = $region24
        $region23: #{tpu_custom_call.1} parent=11 // pred_region
          _
        $region24: #{tpu_custom_call.1} parent=11 // pred_fallthru
          _
        // Predicated region
        $region25: #{tpu_custom_call.1} parent=11 // pred_check
          %p300 = pneg %p175
        $region26: #{tpu_custom_call.1} parent=11 // pred_check_branch
          %302 = sbr.rel (%p300) target = $region28
        $region27: #{tpu_custom_call.1} parent=11 // pred_region
          _
        $region28: #{tpu_custom_call.1} parent=11 // pred_fallthru
          _
        // Predicated region
        $region29: #{tpu_custom_call.1} parent=11 // pred_check
          %p303 = pneg %p196
        $region30: #{tpu_custom_call.1} parent=11 // pred_check_branch
          %305 = sbr.rel (%p303) target = $region32
        $region31: #{tpu_custom_call.1} parent=11 // pred_region
          %s307 = ssub.s32 128, 128
          %308 = vsyncadd [#allocation13], %s307
          %s309 = sshll.u32 [#allocation12], 4
          %s310 = int_to_ptr.vmem [resolvable:$true] %s309
          %315 = dma.hbm_to_vmem [thread:$0]  %s6, 128, %s310, [#allocation13], 64, 64, 4
        $region32: #{tpu_custom_call.1} parent=11 // pred_fallthru
          _
        // Predicated region
        $region33: #{tpu_custom_call.1} parent=11 // pred_check
          %p316 = pneg %p217
        $region34: #{tpu_custom_call.1} parent=11 // pred_check_branch
          %318 = sbr.rel (%p316) target = $region36
        $region35: #{tpu_custom_call.1} parent=11 // pred_region
          _
        $region36: #{tpu_custom_call.1} parent=11 // pred_fallthru
          _
        // Predicated region
        $region37: #{tpu_custom_call.1} parent=11 // pred_check
          %p319 = pneg %p238
        $region38: #{tpu_custom_call.1} parent=11 // pred_check_branch
          %321 = sbr.rel (%p319) target = $region40
        $region39: #{tpu_custom_call.1} parent=11 // pred_region
          _
        $region40: #{tpu_custom_call.1} parent=11 // pred_fallthru
          _
      $region12: #{tpu_custom_call.1} parent=5 // pred_fallthru
        _
      %p322 = scmp.lt.s32.totalorder %s25, 2
      // Predicated region
      $region41: #{tpu_custom_call.1} parent=5 // pred_check
        %p323 = pneg %p322
      $region42: #{tpu_custom_call.1} parent=5 // pred_check_branch
        %325 = sbr.rel (%p323) target = $region44
      $region43: #{tpu_custom_call.1} parent=5 // pred_region
        // Predicated region
        $region45: #{tpu_custom_call.1} parent=43 // pred_check
          %p326 = pneg %p59
        $region46: #{tpu_custom_call.1} parent=43 // pred_check_branch
          %328 = sbr.rel (%p326) target = $region48
        $region47: #{tpu_custom_call.1} parent=43 // pred_region
          %s329 = sand.u32 %s49, 1
          %s330 = scalar_lea.sflag [#allocation7], %s329
          %s331 = sand.u32 %s49, 1
          %s332 = smul.addr %s331, 4
          %s333 = scalar_lea.vmem [#allocation6], %s332
          %s335 = ssub.s32 64, 64
          %336 = vsyncadd %s330, %s335
          %s337 = sadd.s32 %s33, %s32
          %s338 = smul.addr %s337, 64
          %s339 = scalar_lea.hbm %s0, %s338
          %s341 = sshll.u32 %s333, 4
          %s342 = int_to_ptr.vmem [resolvable:$true] %s341
          %344 = dma.hbm_to_vmem [thread:$0]  %s339, 64, %s342, %s330
        $region48: #{tpu_custom_call.1} parent=43 // pred_fallthru
          _
        // Predicated region
        $region49: #{tpu_custom_call.1} parent=43 // pred_check
          %p345 = pneg %p85
        $region50: #{tpu_custom_call.1} parent=43 // pred_check_branch
          %347 = sbr.rel (%p345) target = $region52
        $region51: #{tpu_custom_call.1} parent=43 // pred_region
          %s348 = sand.u32 %s25, 1
          %s349 = scalar_lea.sflag [#allocation10], %s348
          %s350 = sand.u32 %s75, 1
          %s351 = smul.addr %s350, 8
          %s352 = scalar_lea.vmem [#allocation9], %s351
          %s354 = ssub.s32 128, 128
          %355 = vsyncadd %s349, %s354
          %s356 = smul.addr %s32, 2
          %s357 = smul.addr %s356, 64
          %s358 = scalar_lea.hbm %s1, %s357
          %s359 = sshll.u32 %s352, 4
          %s360 = int_to_ptr.vmem [resolvable:$true] %s359
          %365 = dma.hbm_to_vmem [thread:$0]  %s358, 128, %s360, %s349, 64, 64, 4
        $region52: #{tpu_custom_call.1} parent=43 // pred_fallthru
          _
      $region44: #{tpu_custom_call.1} parent=5 // pred_fallthru
        _
      %p366 = scmp.le.s32.totalorder 1, %s25
      %p367 = scmp.lt.s32.totalorder %s25, 3
      %p368 = pnand %p366, %p367
      %p369 = pneg %p368
      // Predicated region
      $region53: #{tpu_custom_call.1} parent=5 // pred_check
        _
      $region54: #{tpu_custom_call.1} parent=5 // pred_check_branch
        %371 = sbr.rel (%p368) target = $region56
      $region55: #{tpu_custom_call.1} parent=5 // pred_region
        %s372 = ssub.s32 %s25, 1
        %s373 = sand.u32 %s52, 1
        %s374 = scalar_lea.sflag [#allocation7], %s373
        %s375 = sand.u32 %s52, 1
        %s376 = smul.addr %s375, 4
        %s377 = scalar_lea.vmem [#allocation6], %s376
        // Predicated region
        $region57: #{tpu_custom_call.1} parent=55 // pred_check
          %p378 = pneg %p65
        $region58: #{tpu_custom_call.1} parent=55 // pred_check_branch
          %380 = sbr.rel (%p378) target = $region60
        $region59: #{tpu_custom_call.1} parent=55 // pred_region
          %381 = dma.done %s374, 64
        $region60: #{tpu_custom_call.1} parent=55 // pred_fallthru
          _
        %s382 = sand.u32 %s30, 1
        %s383 = scalar_lea.sflag [#allocation10], %s382
        %s384 = sand.u32 %s78, 1
        %s385 = smul.addr %s384, 8
        %s386 = scalar_lea.vmem [#allocation9], %s385
        // Predicated region
        $region61: #{tpu_custom_call.1} parent=55 // pred_check
          %p387 = pneg %p91
        $region62: #{tpu_custom_call.1} parent=55 // pred_check_branch
          %389 = sbr.rel (%p387) target = $region64
        $region63: #{tpu_custom_call.1} parent=55 // pred_region
          %390 = dma.done %s383, 128
        $region64: #{tpu_custom_call.1} parent=55 // pred_fallthru
          _
        // Predicated region
        $region65: #{tpu_custom_call.1} parent=55 // pred_check
          %p391 = pneg %p112
        $region66: #{tpu_custom_call.1} parent=55 // pred_check_branch
          %393 = sbr.rel (%p391) target = $region68
        $region67: #{tpu_custom_call.1} parent=55 // pred_region
          %394 = dma.done [#allocation10], 256
        $region68: #{tpu_custom_call.1} parent=55 // pred_fallthru
          _
        // Predicated region
        $region69: #{tpu_custom_call.1} parent=55 // pred_check
          %p395 = pneg %p196
        $region70: #{tpu_custom_call.1} parent=55 // pred_check_branch
          %397 = sbr.rel (%p395) target = $region72
        $region71: #{tpu_custom_call.1} parent=55 // pred_region
          %398 = dma.done [#allocation13], 128
        $region72: #{tpu_custom_call.1} parent=55 // pred_fallthru
          _
        %s399 = sand.u32 %s52, 1
        %s400 = scalar_lea.sflag [#allocation7], %s399
        %s401 = sand.u32 %s52, 1
        %s402 = smul.addr %s401, 4
        %s403 = scalar_lea.vmem [#allocation6], %s402
        %p404 = pneg %p65
        %p405 = pneg %p62
        %s406 = sand.u32 %s30, 1
        %s407 = scalar_lea.sflag [#allocation10], %s406
        %s408 = sand.u32 %s78, 1
        %s409 = smul.addr %s408, 8
        %s410 = scalar_lea.vmem [#allocation9], %s409
        %p411 = pneg %p91
        %p412 = pneg %p88
        %p413 = pneg %p112
        %p414 = pneg %p109
        %p415 = pneg %p133
        %p416 = pneg %p130
        %p417 = pneg %p154
        %p418 = pneg %p151
        %p419 = pneg %p175
        %p420 = pneg %p172
        %p421 = pneg %p196
        %p422 = pneg %p193
        %p423 = pneg %p217
        %p424 = pneg %p214
        %p425 = pneg %p238
        %p426 = pneg %p235
        %p427 = pneg %p266
        %p428 = pneg %p263
        %s429 = sand.u32 %s253, 1
        %s430 = scalar_lea.sflag [#allocation8], %s429
        %s431 = sand.u32 %s253, 1
        %s432 = smul.addr %s431, 8
        %s433 = scalar_lea.vmem [#allocation14], %s432
        %p435 = scmp.eq.s32.totalorder %s35, 0
        // Predicated region
        $region73: #{tpu_custom_call.1} parent=55 // pred_check
          %p436 = pneg %p435
        $region74: #{tpu_custom_call.1} parent=55 // pred_check_branch
          %438 = sbr.rel (%p436) target = $region76
        $region75: #{tpu_custom_call.1} parent=55 // pred_region
          %v439 = vld [vmem:[%s386] sm:$0xf]
          %v440 = vld [vmem:[%s386 + $0x4] sm:$0xf]
          %v441 = vld [vmem:[%s4] sm:$0xf]
          %v442 = vld [vmem:[%s4 + $0x4] sm:$0xf]
          %v443 = vld [vmem:[%s5] sm:$0x1]
          %v445 = vlaneseq
          %v446 = vshrl.u32 %v445, 7
          %v447 = vsub.s32 0, %v446
          %v448 = vrot.slane %v443, %v447
          %v452 = vunpack.c.l.b16 %v439
          %v453 = vunpack.c.l.b16 %v440
          %v454 = vpack.c.b16 %v453, %v452
          %v457 = vunpack.c.l.b16 %v441
          %v458 = vunpack.c.l.b16 %v442
          %v459 = vpack.c.b16 %v458, %v457
          %vm461 = vcmask 130048
          %v463 = vsel %vm461, %v454, 0
          %465 = vmatprep.subr.bf16.mxu0 0
          %466 = vmatpush1.bf16.msra.mxu0 %v459
          %467 = vmatprep.subr.bf16.mxu0 0
          %468 = vmatpush1.bf16.msra.mxu0 0
          %469 = vmatprep.subr.bf16.mxu0 0
          %470 = vmatpush1.bf16.msra.mxu0 0
          %471 = vmatprep.subr.bf16.mxu0 0
          %472 = vmatpush1.bf16.msra.mxu0 0
          %473 = vmatprep.subr.bf16.mxu0 0
          %474 = vmatpush1.bf16.msra.mxu0 0
          %475 = vmatprep.subr.bf16.mxu0 0
          %476 = vmatpush1.bf16.msra.mxu0 0
          %477 = vmatprep.subr.bf16.mxu0 0
          %478 = vmatpush1.bf16.msra.mxu0 0
          %479 = vmatprep.subr.bf16.mxu0 0
          %480 = vmatpush1.bf16.msra.mxu0 0
          %481 = vmatprep.subr.bf16.mxu0 0
          %482 = vmatpush1.bf16.msra.mxu0 0
          %483 = vmatprep.subr.bf16.mxu0 0
          %484 = vmatpush1.bf16.msra.mxu0 0
          %485 = vmatprep.subr.bf16.mxu0 0
          %486 = vmatpush1.bf16.msra.mxu0 0
          %487 = vmatprep.subr.bf16.mxu0 0
          %488 = vmatpush1.bf16.msra.mxu0 0
          %489 = vmatprep.subr.bf16.mxu0 0
          %490 = vmatpush1.bf16.msra.mxu0 0
          %491 = vmatprep.subr.bf16.mxu0 0
          %492 = vmatpush1.bf16.msra.mxu0 0
          %493 = vmatprep.subr.bf16.mxu0 0
          %494 = vmatpush1.bf16.msra.mxu0 0
          %495 = vmatprep.subr.bf16.mxu0 0
          %496 = vmatpush1.bf16.msra.mxu0 0
          %497 = vmatprep.mubr.bf16.mxu0 0
          %498 = vmatmul.mubr.bf16.gmra.mrb[0].mxu0 %v463
          %v499 = vpop.f32.mrb[0].mxu0
          %v500 = vadd.f32 %v448, %v499
          %v501 = vpop.f32.mrb[0].mxu0
          %v502 = vpop.f32.mrb[0].mxu0
          %v503 = vadd.f32 %v448, %v502
          %v504 = vpop.f32.mrb[0].mxu0
          %505 = vdwg.mxu0
          %v506 = vld [vmem:[#allocation12] sm:$0xf]
          %v507 = vld [vmem:[#allocation12 + $0x4] sm:$0xf]
          %v508 = vld [vmem:[%s7] sm:$0x1]
          %v510 = vlaneseq
          %v511 = vshrl.u32 %v510, 7
          %v512 = vsub.s32 0, %v511
          %v513 = vrot.slane %v508, %v512
          %v517 = vunpack.c.l.b16 %v506
          %v518 = vunpack.c.l.b16 %v507
          %v519 = vpack.c.b16 %v518, %v517
          %521 = vmatprep.subr.bf16.mxu0 0
          %522 = vmatpush1.bf16.msra.mxu0 %v519
          %523 = vmatprep.subr.bf16.mxu0 0
          %524 = vmatpush1.bf16.msra.mxu0 0
          %525 = vmatprep.subr.bf16.mxu0 0
          %526 = vmatpush1.bf16.msra.mxu0 0
          %527 = vmatprep.subr.bf16.mxu0 0
          %528 = vmatpush1.bf16.msra.mxu0 0
          %529 = vmatprep.subr.bf16.mxu0 0
          %530 = vmatpush1.bf16.msra.mxu0 0
          %531 = vmatprep.subr.bf16.mxu0 0
          %532 = vmatpush1.bf16.msra.mxu0 0
          %533 = vmatprep.subr.bf16.mxu0 0
          %534 = vmatpush1.bf16.msra.mxu0 0
          %535 = vmatprep.subr.bf16.mxu0 0
          %536 = vmatpush1.bf16.msra.mxu0 0
          %537 = vmatprep.subr.bf16.mxu0 0
          %538 = vmatpush1.bf16.msra.mxu0 0
          %539 = vmatprep.subr.bf16.mxu0 0
          %540 = vmatpush1.bf16.msra.mxu0 0
          %541 = vmatprep.subr.bf16.mxu0 0
          %542 = vmatpush1.bf16.msra.mxu0 0
          %543 = vmatprep.subr.bf16.mxu0 0
          %544 = vmatpush1.bf16.msra.mxu0 0
          %545 = vmatprep.subr.bf16.mxu0 0
          %546 = vmatpush1.bf16.msra.mxu0 0
          %547 = vmatprep.subr.bf16.mxu0 0
          %548 = vmatpush1.bf16.msra.mxu0 0
          %549 = vmatprep.subr.bf16.mxu0 0
          %550 = vmatpush1.bf16.msra.mxu0 0
          %551 = vmatprep.subr.bf16.mxu0 0
          %552 = vmatpush1.bf16.msra.mxu0 0
          %553 = vmatprep.mubr.bf16.mxu0 0
          %554 = vmatmul.mubr.bf16.gmra.mrb[0].mxu0 %v463
          %v555 = vpop.f32.mrb[0].mxu0
          %v556 = vadd.f32 %v513, %v555
          %v557 = vpop.f32.mrb[0].mxu0
          %v558 = vpop.f32.mrb[0].mxu0
          %v559 = vadd.f32 %v513, %v558
          %v560 = vpop.f32.mrb[0].mxu0
          %561 = vdwg.mxu0
          %v562 = vpack.c.bf16 %v503, %v500
          %v563 = vpack.c.bf16 %v559, %v556
          %vm564 = vcmask 64512
          %565 = vst.msk [vmem:[#allocation2] sm:$0xff] %vm564, %v562
          %566 = vst.msk [vmem:[#allocation3] sm:$0xff] %vm564, %v563
          %568 = vrot.lane.b32.xlu0 %v562, 120
          %v569 = vpop.permute.xlu0 %568
          %s571 = scalar_lea.vmem [#allocation2], 8
          %572 = vst.msk [vmem:[%s571] sm:$0xff] %vm564, %v569
          %574 = vrot.lane.b32.xlu0 %v563, 120
          %v575 = vpop.permute.xlu0 %574
          %s577 = scalar_lea.vmem [#allocation3], 8
          %578 = vst.msk [vmem:[%s577] sm:$0xff] %vm564, %v575
          %579 = vrot.lane.b32.xlu0 %v562, 112
          %v580 = vpop.permute.xlu0 %579
          %s582 = scalar_lea.vmem [#allocation2], 16
          %583 = vst.msk [vmem:[%s582] sm:$0xff] %vm564, %v580
          %584 = vrot.lane.b32.xlu0 %v563, 112
          %v585 = vpop.permute.xlu0 %584
          %s587 = scalar_lea.vmem [#allocation3], 16
          %588 = vst.msk [vmem:[%s587] sm:$0xff] %vm564, %v585
          %589 = vrot.lane.b32.xlu0 %v562, 104
          %v590 = vpop.permute.xlu0 %589
          %s592 = scalar_lea.vmem [#allocation2], 24
          %593 = vst.msk [vmem:[%s592] sm:$0xff] %vm564, %v590
          %594 = vrot.lane.b32.xlu0 %v563, 104
          %v595 = vpop.permute.xlu0 %594
          %s597 = scalar_lea.vmem [#allocation3], 24
          %598 = vst.msk [vmem:[%s597] sm:$0xff] %vm564, %v595
        $region76: #{tpu_custom_call.1} parent=55 // pred_fallthru
          _
        %v599 = vld [vmem:[%s377] sm:$0xf]
        %v600 = vld [vmem:[#allocation11] sm:$0xf]
        %v601 = vld [vmem:[#allocation11 + $0x4] sm:$0xf]
        %v602 = vld [vmem:[#allocation11 + $0x8] sm:$0xf]
        %v603 = vld [vmem:[#allocation11 + $0xc] sm:$0xf]
        %v604 = vld [vmem:[%s3] sm:$0x1]
        %v606 = vlaneseq
        %v607 = vshrl.u32 %v606, 7
        %v608 = vsub.s32 0, %v607
        %v609 = vrot.slane %v604, %v608
        %v615 = vunpack.c.l.b16 %v600
        %v616 = vunpack.c.l.b16 %v601
        %v617 = vunpack.c.l.b16 %v602
        %v618 = vunpack.c.l.b16 %v603
        %v619 = vpack.c.b16 %v616, %v615
        %v620 = vpack.c.b16 %v618, %v617
        %vm623 = vcmask 261120
        %v625 = vsel %vm623, %v599, 0
        %627 = vmatprep.subr.bf16.mxu0 0
        %628 = vmatpush1.bf16.msra.mxu0 %v619
        %629 = vmatprep.subr.bf16.mxu0 0
        %630 = vmatpush1.bf16.msra.mxu0 %v620
        %631 = vmatprep.subr.bf16.mxu0 0
        %632 = vmatpush1.bf16.msra.mxu0 0
        %633 = vmatprep.subr.bf16.mxu0 0
        %634 = vmatpush1.bf16.msra.mxu0 0
        %635 = vmatprep.subr.bf16.mxu0 0
        %636 = vmatpush1.bf16.msra.mxu0 0
        %637 = vmatprep.subr.bf16.mxu0 0
        %638 = vmatpush1.bf16.msra.mxu0 0
        %639 = vmatprep.subr.bf16.mxu0 0
        %640 = vmatpush1.bf16.msra.mxu0 0
        %641 = vmatprep.subr.bf16.mxu0 0
        %642 = vmatpush1.bf16.msra.mxu0 0
        %643 = vmatprep.subr.bf16.mxu0 0
        %644 = vmatpush1.bf16.msra.mxu0 0
        %645 = vmatprep.subr.bf16.mxu0 0
        %646 = vmatpush1.bf16.msra.mxu0 0
        %647 = vmatprep.subr.bf16.mxu0 0
        %648 = vmatpush1.bf16.msra.mxu0 0
        %649 = vmatprep.subr.bf16.mxu0 0
        %650 = vmatpush1.bf16.msra.mxu0 0
        %651 = vmatprep.subr.bf16.mxu0 0
        %652 = vmatpush1.bf16.msra.mxu0 0
        %653 = vmatprep.subr.bf16.mxu0 0
        %654 = vmatpush1.bf16.msra.mxu0 0
        %655 = vmatprep.subr.bf16.mxu0 0
        %656 = vmatpush1.bf16.msra.mxu0 0
        %657 = vmatprep.subr.bf16.mxu0 0
        %658 = vmatpush1.bf16.msra.mxu0 0
        %659 = vmatprep.mubr.bf16.mxu0 0
        %660 = vmatmul.mubr.bf16.gmra.mrb[0].mxu0 %v625
        %v661 = vpop.f32.mrb[0].mxu0
        %v662 = vadd.f32 %v609, %v661
        %v663 = vpop.f32.mrb[0].mxu0
        %v664 = vpop.f32.mrb[0].mxu0
        %v665 = vpop.f32.mrb[0].mxu0
        %666 = vdwg.mxu0
        %v667 = vpack.c.bf16 %v662, %v662
        %vm668 = vcmask 60416
        %669 = vst.msk [vmem:[#allocation4] sm:$0xf] %vm668, %v667
        %v671 = vunpack.c.l.b16 %v667
        %v672 = vpack.c.b16 %v671, %v671
        %673 = vrot.lane.b32.xlu0 %v672, 120
        %v674 = vpop.permute.xlu0 %673
        %s676 = scalar_lea.vmem [#allocation4], 4
        %677 = vst.msk [vmem:[%s676] sm:$0xf] %vm668, %v674
        %678 = vrot.lane.b32.xlu0 %v672, 112
        %v679 = vpop.permute.xlu0 %678
        %s681 = scalar_lea.vmem [#allocation4], 8
        %682 = vst.msk [vmem:[%s681] sm:$0xf] %vm668, %v679
        %683 = vrot.lane.b32.xlu0 %v672, 104
        %v684 = vpop.permute.xlu0 %683
        %s686 = scalar_lea.vmem [#allocation4], 12
        %687 = vst.msk [vmem:[%s686] sm:$0xf] %vm668, %v684
        %v688 = vld [vmem:[#allocation4] sm:$0xf]
        %v689 = vld [vmem:[#allocation4 + $0x4] sm:$0xf]
        %v690 = vld [vmem:[#allocation4 + $0x8] sm:$0xf]
        %v691 = vld [vmem:[#allocation4 + $0xc] sm:$0xf]
        %v692 = vld [vmem:[#allocation2] sm:$0xff]
        %v693 = vld [vmem:[#allocation2 + $0x8] sm:$0xff]
        %v694 = vld [vmem:[#allocation2 + $0x10] sm:$0xff]
        %v695 = vld [vmem:[#allocation2 + $0x18] sm:$0xff]
        %v696 = vld [vmem:[#allocation3] sm:$0xff]
        %v697 = vld [vmem:[#allocation3 + $0x8] sm:$0xff]
        %v698 = vld [vmem:[#allocation3 + $0x10] sm:$0xff]
        %v699 = vld [vmem:[#allocation3 + $0x18] sm:$0xff]
        %vm700 = vcmask 64512
        %v702 = vsel %vm700, %v688, 0
        %v705 = vsel %vm700, %v692, 0
        %707 = vmatprep.subr.bf16.mxu0 0
        %708 = vmatpush1.bf16.xpose.msra.mxu0 %v705
        %709 = vmatprep.subr.bf16.mxu0 0
        %710 = vmatpush1.bf16.xpose.msra.mxu0 0
        %711 = vmatprep.subr.bf16.mxu0 0
        %712 = vmatpush1.bf16.xpose.msra.mxu0 0
        %713 = vmatprep.subr.bf16.mxu0 0
        %714 = vmatpush1.bf16.xpose.msra.mxu0 0
        %715 = vmatprep.subr.bf16.mxu0 0
        %716 = vmatpush1.bf16.xpose.msra.mxu0 0
        %717 = vmatprep.subr.bf16.mxu0 0
        %718 = vmatpush1.bf16.xpose.msra.mxu0 0
        %719 = vmatprep.subr.bf16.mxu0 0
        %720 = vmatpush1.bf16.xpose.msra.mxu0 0
        %721 = vmatprep.subr.bf16.mxu0 0
        %722 = vmatpush1.bf16.xpose.msra.mxu0 0
        %723 = vmatprep.subr.bf16.mxu0 0
        %724 = vmatpush1.bf16.xpose.msra.mxu0 0
        %725 = vmatprep.subr.bf16.mxu0 0
        %726 = vmatpush1.bf16.xpose.msra.mxu0 0
        %727 = vmatprep.subr.bf16.mxu0 0
        %728 = vmatpush1.bf16.xpose.msra.mxu0 0
        %729 = vmatprep.subr.bf16.mxu0 0
        %730 = vmatpush1.bf16.xpose.msra.mxu0 0
        %731 = vmatprep.subr.bf16.mxu0 0
        %732 = vmatpush1.bf16.xpose.msra.mxu0 0
        %733 = vmatprep.subr.bf16.mxu0 0
        %734 = vmatpush1.bf16.xpose.msra.mxu0 0
        %735 = vmatprep.subr.bf16.mxu0 0
        %736 = vmatpush1.bf16.xpose.msra.mxu0 0
        %737 = vmatprep.subr.bf16.mxu0 0
        %738 = vmatpush1.bf16.xpose.msra.mxu0 0
        %739 = vmatprep.mubr.bf16.mxu0 0
        %740 = vmatmul.mubr.bf16.gmra.mrb[0].mxu0 %v702
        %v741 = vpop.f32.mrb[0].mxu0
        %v742 = vadd.f32 0.0, %v741
        %v743 = vpop.f32.mrb[0].mxu0
        %v744 = vpop.f32.mrb[0].mxu0
        %v745 = vpop.f32.mrb[0].mxu0
        %746 = vdwg.mxu0
        %v748 = vsel %vm700, %v689, 0
        %v751 = vsel %vm700, %v693, 0
        %753 = vmatprep.subr.bf16.mxu0 0
        %754 = vmatpush1.bf16.xpose.msra.mxu0 %v751
        %755 = vmatprep.subr.bf16.mxu0 0
        %756 = vmatpush1.bf16.xpose.msra.mxu0 0
        %757 = vmatprep.subr.bf16.mxu0 0
        %758 = vmatpush1.bf16.xpose.msra.mxu0 0
        %759 = vmatprep.subr.bf16.mxu0 0
        %760 = vmatpush1.bf16.xpose.msra.mxu0 0
        %761 = vmatprep.subr.bf16.mxu0 0
        %762 = vmatpush1.bf16.xpose.msra.mxu0 0
        %763 = vmatprep.subr.bf16.mxu0 0
        %764 = vmatpush1.bf16.xpose.msra.mxu0 0
        %765 = vmatprep.subr.bf16.mxu0 0
        %766 = vmatpush1.bf16.xpose.msra.mxu0 0
        %767 = vmatprep.subr.bf16.mxu0 0
        %768 = vmatpush1.bf16.xpose.msra.mxu0 0
        %769 = vmatprep.subr.bf16.mxu0 0
        %770 = vmatpush1.bf16.xpose.msra.mxu0 0
        %771 = vmatprep.subr.bf16.mxu0 0
        %772 = vmatpush1.bf16.xpose.msra.mxu0 0
        %773 = vmatprep.subr.bf16.mxu0 0
        %774 = vmatpush1.bf16.xpose.msra.mxu0 0
        %775 = vmatprep.subr.bf16.mxu0 0
        %776 = vmatpush1.bf16.xpose.msra.mxu0 0
        %777 = vmatprep.subr.bf16.mxu0 0
        %778 = vmatpush1.bf16.xpose.msra.mxu0 0
        %779 = vmatprep.subr.bf16.mxu0 0
        %780 = vmatpush1.bf16.xpose.msra.mxu0 0
        %781 = vmatprep.subr.bf16.mxu0 0
        %782 = vmatpush1.bf16.xpose.msra.mxu0 0
        %783 = vmatprep.subr.bf16.mxu0 0
        %784 = vmatpush1.bf16.xpose.msra.mxu0 0
        %785 = vmatprep.mubr.bf16.mxu0 0
        %786 = vmatmul.mubr.bf16.gmra.mrb[0].mxu0 %v748
        %v787 = vpop.f32.mrb[0].mxu0
        %v788 = vadd.f32 0.0, %v787
        %v789 = vpop.f32.mrb[0].mxu0
        %v790 = vpop.f32.mrb[0].mxu0
        %v791 = vpop.f32.mrb[0].mxu0
        %792 = vdwg.mxu0
        %v794 = vsel %vm700, %v690, 0
        %v797 = vsel %vm700, %v694, 0
        %799 = vmatprep.subr.bf16.mxu0 0
        %800 = vmatpush1.bf16.xpose.msra.mxu0 %v797
        %801 = vmatprep.subr.bf16.mxu0 0
        %802 = vmatpush1.bf16.xpose.msra.mxu0 0
        %803 = vmatprep.subr.bf16.mxu0 0
        %804 = vmatpush1.bf16.xpose.msra.mxu0 0
        %805 = vmatprep.subr.bf16.mxu0 0
        %806 = vmatpush1.bf16.xpose.msra.mxu0 0
        %807 = vmatprep.subr.bf16.mxu0 0
        %808 = vmatpush1.bf16.xpose.msra.mxu0 0
        %809 = vmatprep.subr.bf16.mxu0 0
        %810 = vmatpush1.bf16.xpose.msra.mxu0 0
        %811 = vmatprep.subr.bf16.mxu0 0
        %812 = vmatpush1.bf16.xpose.msra.mxu0 0
        %813 = vmatprep.subr.bf16.mxu0 0
        %814 = vmatpush1.bf16.xpose.msra.mxu0 0
        %815 = vmatprep.subr.bf16.mxu0 0
        %816 = vmatpush1.bf16.xpose.msra.mxu0 0
        %817 = vmatprep.subr.bf16.mxu0 0
        %818 = vmatpush1.bf16.xpose.msra.mxu0 0
        %819 = vmatprep.subr.bf16.mxu0 0
        %820 = vmatpush1.bf16.xpose.msra.mxu0 0
        %821 = vmatprep.subr.bf16.mxu0 0
        %822 = vmatpush1.bf16.xpose.msra.mxu0 0
        %823 = vmatprep.subr.bf16.mxu0 0
        %824 = vmatpush1.bf16.xpose.msra.mxu0 0
        %825 = vmatprep.subr.bf16.mxu0 0
        %826 = vmatpush1.bf16.xpose.msra.mxu0 0
        %827 = vmatprep.subr.bf16.mxu0 0
        %828 = vmatpush1.bf16.xpose.msra.mxu0 0
        %829 = vmatprep.subr.bf16.mxu0 0
        %830 = vmatpush1.bf16.xpose.msra.mxu0 0
        %831 = vmatprep.mubr.bf16.mxu0 0
        %832 = vmatmul.mubr.bf16.gmra.mrb[0].mxu0 %v794
        %v833 = vpop.f32.mrb[0].mxu0
        %v834 = vadd.f32 0.0, %v833
        %v835 = vpop.f32.mrb[0].mxu0
        %v836 = vpop.f32.mrb[0].mxu0
        %v837 = vpop.f32.mrb[0].mxu0
        %838 = vdwg.mxu0
        %v840 = vsel %vm700, %v691, 0
        %v843 = vsel %vm700, %v695, 0
        %845 = vmatprep.subr.bf16.mxu0 0
        %846 = vmatpush1.bf16.xpose.msra.mxu0 %v843
        %847 = vmatprep.subr.bf16.mxu0 0
        %848 = vmatpush1.bf16.xpose.msra.mxu0 0
        %849 = vmatprep.subr.bf16.mxu0 0
        %850 = vmatpush1.bf16.xpose.msra.mxu0 0
        %851 = vmatprep.subr.bf16.mxu0 0
        %852 = vmatpush1.bf16.xpose.msra.mxu0 0
        %853 = vmatprep.subr.bf16.mxu0 0
        %854 = vmatpush1.bf16.xpose.msra.mxu0 0
        %855 = vmatprep.subr.bf16.mxu0 0
        %856 = vmatpush1.bf16.xpose.msra.mxu0 0
        %857 = vmatprep.subr.bf16.mxu0 0
        %858 = vmatpush1.bf16.xpose.msra.mxu0 0
        %859 = vmatprep.subr.bf16.mxu0 0
        %860 = vmatpush1.bf16.xpose.msra.mxu0 0
        %861 = vmatprep.subr.bf16.mxu0 0
        %862 = vmatpush1.bf16.xpose.msra.mxu0 0
        %863 = vmatprep.subr.bf16.mxu0 0
        %864 = vmatpush1.bf16.xpose.msra.mxu0 0
        %865 = vmatprep.subr.bf16.mxu0 0
        %866 = vmatpush1.bf16.xpose.msra.mxu0 0
        %867 = vmatprep.subr.bf16.mxu0 0
        %868 = vmatpush1.bf16.xpose.msra.mxu0 0
        %869 = vmatprep.subr.bf16.mxu0 0
        %870 = vmatpush1.bf16.xpose.msra.mxu0 0
        %871 = vmatprep.subr.bf16.mxu0 0
        %872 = vmatpush1.bf16.xpose.msra.mxu0 0
        %873 = vmatprep.subr.bf16.mxu0 0
        %874 = vmatpush1.bf16.xpose.msra.mxu0 0
        %875 = vmatprep.subr.bf16.mxu0 0
        %876 = vmatpush1.bf16.xpose.msra.mxu0 0
        %877 = vmatprep.mubr.bf16.mxu0 0
        %878 = vmatmul.mubr.bf16.gmra.mrb[0].mxu0 %v840
        %v879 = vpop.f32.mrb[0].mxu0
        %v880 = vadd.f32 0.0, %v879
        %v881 = vpop.f32.mrb[0].mxu0
        %v882 = vpop.f32.mrb[0].mxu0
        %v883 = vpop.f32.mrb[0].mxu0
        %884 = vdwg.mxu0
        %vm885 = vcmask 130048
        %v886 = vsel %vm885, %v742, -inf
        %887 = vmax.xlane.f32.xlu0 %v886
        %v888 = vpop.xlane.xlu0 %887
        %v889 = vsel %vm885, %v788, -inf
        %890 = vmax.xlane.f32.xlu0 %v889
        %v891 = vpop.xlane.xlu0 %890
        %v892 = vsel %vm885, %v834, -inf
        %893 = vmax.xlane.f32.xlu0 %v892
        %v894 = vpop.xlane.xlu0 %893
        %v895 = vsel %vm885, %v880, -inf
        %896 = vmax.xlane.f32.xlu0 %v895
        %v897 = vpop.xlane.xlu0 %896
        %v898 = vsub.f32 %v742, %v888
        %v899 = vsub.f32 %v788, %v891
        %v900 = vsub.f32 %v834, %v894
        %v901 = vsub.f32 %v880, %v897
        %v902 = vpack.c.bf16 %v898, %v898
        %v903 = vpack.c.bf16 %v899, %v899
        %v904 = vpack.c.bf16 %v900, %v900
        %v905 = vpack.c.bf16 %v901, %v901
        %v907 = vmul.bf16 %v902, 1069105081
        %v908 = vpow.bf16.pop %v907
        %v910 = vmul.bf16 %v903, 1069105081
        %v911 = vpow.bf16.pop %v910
        %v913 = vmul.bf16 %v904, 1069105081
        %v914 = vpow.bf16.pop %v913
        %v916 = vmul.bf16 %v905, 1069105081
        %v917 = vpow.bf16.pop %v916
        %v918 = vunpack.c.l.bf16 %v908
        %v919 = vunpack.c.l.bf16 %v911
        %v920 = vunpack.c.l.bf16 %v914
        %v921 = vunpack.c.l.bf16 %v917
        %v922 = vsel %vm885, %v918, 0.0
        %923 = vadd.xlane.f32.xlu0 %v922
        %v924 = vpop.xlane.xlu0 %923
        %v925 = vsel %vm885, %v919, 0.0
        %926 = vadd.xlane.f32.xlu0 %v925
        %v927 = vpop.xlane.xlu0 %926
        %v928 = vsel %vm885, %v920, 0.0
        %929 = vadd.xlane.f32.xlu0 %v928
        %v930 = vpop.xlane.xlu0 %929
        %v931 = vsel %vm885, %v921, 0.0
        %932 = vadd.xlane.f32.xlu0 %v931
        %v933 = vpop.xlane.xlu0 %932
        %v935 = vsel %vm885, %v908, 0
        %937 = vmatprep.subr.bf16.mxu0 0
        %938 = vmatpush1.bf16.msra.mxu0 %v696
        %939 = vmatprep.subr.bf16.mxu0 0
        %940 = vmatpush1.bf16.msra.mxu0 0
        %941 = vmatprep.subr.bf16.mxu0 0
        %942 = vmatpush1.bf16.msra.mxu0 0
        %943 = vmatprep.subr.bf16.mxu0 0
        %944 = vmatpush1.bf16.msra.mxu0 0
        %945 = vmatprep.subr.bf16.mxu0 0
        %946 = vmatpush1.bf16.msra.mxu0 0
        %947 = vmatprep.subr.bf16.mxu0 0
        %948 = vmatpush1.bf16.msra.mxu0 0
        %949 = vmatprep.subr.bf16.mxu0 0
        %950 = vmatpush1.bf16.msra.mxu0 0
        %951 = vmatprep.subr.bf16.mxu0 0
        %952 = vmatpush1.bf16.msra.mxu0 0
        %953 = vmatprep.subr.bf16.mxu0 0
        %954 = vmatpush1.bf16.msra.mxu0 0
        %955 = vmatprep.subr.bf16.mxu0 0
        %956 = vmatpush1.bf16.msra.mxu0 0
        %957 = vmatprep.subr.bf16.mxu0 0
        %958 = vmatpush1.bf16.msra.mxu0 0
        %959 = vmatprep.subr.bf16.mxu0 0
        %960 = vmatpush1.bf16.msra.mxu0 0
        %961 = vmatprep.subr.bf16.mxu0 0
        %962 = vmatpush1.bf16.msra.mxu0 0
        %963 = vmatprep.subr.bf16.mxu0 0
        %964 = vmatpush1.bf16.msra.mxu0 0
        %965 = vmatprep.subr.bf16.mxu0 0
        %966 = vmatpush1.bf16.msra.mxu0 0
        %967 = vmatprep.subr.bf16.mxu0 0
        %968 = vmatpush1.bf16.msra.mxu0 0
        %969 = vmatprep.mubr.bf16.mxu0 0
        %970 = vmatmul.mubr.bf16.gmra.mrb[0].mxu0 %v935
        %v971 = vpop.f32.mrb[0].mxu0
        %v972 = vadd.f32 0.0, %v971
        %v973 = vpop.f32.mrb[0].mxu0
        %v974 = vpop.f32.mrb[0].mxu0
        %v975 = vpop.f32.mrb[0].mxu0
        %976 = vdwg.mxu0
        %v978 = vsel %vm885, %v911, 0
        %980 = vmatprep.subr.bf16.mxu0 0
        %981 = vmatpush1.bf16.msra.mxu0 %v697
        %982 = vmatprep.subr.bf16.mxu0 0
        %983 = vmatpush1.bf16.msra.mxu0 0
        %984 = vmatprep.subr.bf16.mxu0 0
        %985 = vmatpush1.bf16.msra.mxu0 0
        %986 = vmatprep.subr.bf16.mxu0 0
        %987 = vmatpush1.bf16.msra.mxu0 0
        %988 = vmatprep.subr.bf16.mxu0 0
        %989 = vmatpush1.bf16.msra.mxu0 0
        %990 = vmatprep.subr.bf16.mxu0 0
        %991 = vmatpush1.bf16.msra.mxu0 0
        %992 = vmatprep.subr.bf16.mxu0 0
        %993 = vmatpush1.bf16.msra.mxu0 0
        %994 = vmatprep.subr.bf16.mxu0 0
        %995 = vmatpush1.bf16.msra.mxu0 0
        %996 = vmatprep.subr.bf16.mxu0 0
        %997 = vmatpush1.bf16.msra.mxu0 0
        %998 = vmatprep.subr.bf16.mxu0 0
        %999 = vmatpush1.bf16.msra.mxu0 0
        %1000 = vmatprep.subr.bf16.mxu0 0
        %1001 = vmatpush1.bf16.msra.mxu0 0
        %1002 = vmatprep.subr.bf16.mxu0 0
        %1003 = vmatpush1.bf16.msra.mxu0 0
        %1004 = vmatprep.subr.bf16.mxu0 0
        %1005 = vmatpush1.bf16.msra.mxu0 0
        %1006 = vmatprep.subr.bf16.mxu0 0
        %1007 = vmatpush1.bf16.msra.mxu0 0
        %1008 = vmatprep.subr.bf16.mxu0 0
        %1009 = vmatpush1.bf16.msra.mxu0 0
        %1010 = vmatprep.subr.bf16.mxu0 0
        %1011 = vmatpush1.bf16.msra.mxu0 0
        %1012 = vmatprep.mubr.bf16.mxu0 0
        %1013 = vmatmul.mubr.bf16.gmra.mrb[0].mxu0 %v978
        %v1014 = vpop.f32.mrb[0].mxu0
        %v1015 = vadd.f32 0.0, %v1014
        %v1016 = vpop.f32.mrb[0].mxu0
        %v1017 = vpop.f32.mrb[0].mxu0
        %v1018 = vpop.f32.mrb[0].mxu0
        %1019 = vdwg.mxu0
        %v1021 = vsel %vm885, %v914, 0
        %1023 = vmatprep.subr.bf16.mxu0 0
        %1024 = vmatpush1.bf16.msra.mxu0 %v698
        %1025 = vmatprep.subr.bf16.mxu0 0
        %1026 = vmatpush1.bf16.msra.mxu0 0
        %1027 = vmatprep.subr.bf16.mxu0 0
        %1028 = vmatpush1.bf16.msra.mxu0 0
        %1029 = vmatprep.subr.bf16.mxu0 0
        %1030 = vmatpush1.bf16.msra.mxu0 0
        %1031 = vmatprep.subr.bf16.mxu0 0
        %1032 = vmatpush1.bf16.msra.mxu0 0
        %1033 = vmatprep.subr.bf16.mxu0 0
        %1034 = vmatpush1.bf16.msra.mxu0 0
        %1035 = vmatprep.subr.bf16.mxu0 0
        %1036 = vmatpush1.bf16.msra.mxu0 0
        %1037 = vmatprep.subr.bf16.mxu0 0
        %1038 = vmatpush1.bf16.msra.mxu0 0
        %1039 = vmatprep.subr.bf16.mxu0 0
        %1040 = vmatpush1.bf16.msra.mxu0 0
        %1041 = vmatprep.subr.bf16.mxu0 0
        %1042 = vmatpush1.bf16.msra.mxu0 0
        %1043 = vmatprep.subr.bf16.mxu0 0
        %1044 = vmatpush1.bf16.msra.mxu0 0
        %1045 = vmatprep.subr.bf16.mxu0 0
        %1046 = vmatpush1.bf16.msra.mxu0 0
        %1047 = vmatprep.subr.bf16.mxu0 0
        %1048 = vmatpush1.bf16.msra.mxu0 0
        %1049 = vmatprep.subr.bf16.mxu0 0
        %1050 = vmatpush1.bf16.msra.mxu0 0
        %1051 = vmatprep.subr.bf16.mxu0 0
        %1052 = vmatpush1.bf16.msra.mxu0 0
        %1053 = vmatprep.subr.bf16.mxu0 0
        %1054 = vmatpush1.bf16.msra.mxu0 0
        %1055 = vmatprep.mubr.bf16.mxu0 0
        %1056 = vmatmul.mubr.bf16.gmra.mrb[0].mxu0 %v1021
        %v1057 = vpop.f32.mrb[0].mxu0
        %v1058 = vadd.f32 0.0, %v1057
        %v1059 = vpop.f32.mrb[0].mxu0
        %v1060 = vpop.f32.mrb[0].mxu0
        %v1061 = vpop.f32.mrb[0].mxu0
        %1062 = vdwg.mxu0
        %v1064 = vsel %vm885, %v917, 0
        %1066 = vmatprep.subr.bf16.mxu0 0
        %1067 = vmatpush1.bf16.msra.mxu0 %v699
        %1068 = vmatprep.subr.bf16.mxu0 0
        %1069 = vmatpush1.bf16.msra.mxu0 0
        %1070 = vmatprep.subr.bf16.mxu0 0
        %1071 = vmatpush1.bf16.msra.mxu0 0
        %1072 = vmatprep.subr.bf16.mxu0 0
        %1073 = vmatpush1.bf16.msra.mxu0 0
        %1074 = vmatprep.subr.bf16.mxu0 0
        %1075 = vmatpush1.bf16.msra.mxu0 0
        %1076 = vmatprep.subr.bf16.mxu0 0
        %1077 = vmatpush1.bf16.msra.mxu0 0
        %1078 = vmatprep.subr.bf16.mxu0 0
        %1079 = vmatpush1.bf16.msra.mxu0 0
        %1080 = vmatprep.subr.bf16.mxu0 0
        %1081 = vmatpush1.bf16.msra.mxu0 0
        %1082 = vmatprep.subr.bf16.mxu0 0
        %1083 = vmatpush1.bf16.msra.mxu0 0
        %1084 = vmatprep.subr.bf16.mxu0 0
        %1085 = vmatpush1.bf16.msra.mxu0 0
        %1086 = vmatprep.subr.bf16.mxu0 0
        %1087 = vmatpush1.bf16.msra.mxu0 0
        %1088 = vmatprep.subr.bf16.mxu0 0
        %1089 = vmatpush1.bf16.msra.mxu0 0
        %1090 = vmatprep.subr.bf16.mxu0 0
        %1091 = vmatpush1.bf16.msra.mxu0 0
        %1092 = vmatprep.subr.bf16.mxu0 0
        %1093 = vmatpush1.bf16.msra.mxu0 0
        %1094 = vmatprep.subr.bf16.mxu0 0
        %1095 = vmatpush1.bf16.msra.mxu0 0
        %1096 = vmatprep.subr.bf16.mxu0 0
        %1097 = vmatpush1.bf16.msra.mxu0 0
        %1098 = vmatprep.mubr.bf16.mxu0 0
        %1099 = vmatmul.mubr.bf16.gmra.mrb[0].mxu0 %v1064
        %v1100 = vpop.f32.mrb[0].mxu0
        %v1101 = vadd.f32 0.0, %v1100
        %v1102 = vpop.f32.mrb[0].mxu0
        %v1103 = vpop.f32.mrb[0].mxu0
        %v1104 = vpop.f32.mrb[0].mxu0
        %1105 = vdwg.mxu0
        %v1106 = vrcp.pop %v924
        %v1107 = vrcp.pop %v927
        %v1108 = vrcp.pop %v930
        %v1109 = vrcp.pop %v933
        %v1110 = vmul.f32 %v972, %v1106
        %v1111 = vmul.f32 %v1015, %v1107
        %v1112 = vmul.f32 %v1058, %v1108
        %v1113 = vmul.f32 %v1101, %v1109
        %v1114 = vpack.c.bf16 %v1110, %v1110
        %v1115 = vpack.c.bf16 %v1111, %v1111
        %v1116 = vpack.c.bf16 %v1112, %v1112
        %v1117 = vpack.c.bf16 %v1113, %v1113
        %1118 = vst.msk [vmem:[#allocation5] sm:$0xf] %vm668, %v1114
        %v1120 = vunpack.c.l.b16 %v1115
        %v1121 = vpack.c.b16 %v1120, %v1120
        %1122 = vrot.lane.b32.xlu0 %v1121, 8
        %v1123 = vpop.permute.xlu0 %1122
        %vm1125 = vcmask 126016
        %1126 = vst.msk [vmem:[#allocation5] sm:$0xf] %vm1125, %v1123
        %v1128 = vunpack.c.l.b16 %v1116
        %v1129 = vpack.c.b16 %v1128, %v1128
        %1130 = vrot.lane.b32.xlu0 %v1129, 16
        %v1131 = vpop.permute.xlu0 %1130
        %vm1133 = vcmask 191616
        %1134 = vst.msk [vmem:[#allocation5] sm:$0xf] %vm1133, %v1131
        %v1136 = vunpack.c.l.b16 %v1117
        %v1137 = vpack.c.b16 %v1136, %v1136
        %1138 = vrot.lane.b32.xlu0 %v1137, 24
        %v1139 = vpop.permute.xlu0 %1138
        %vm1141 = vcmask 257216
        %1142 = vst.msk [vmem:[#allocation5] sm:$0xf] %vm1141, %v1139
        %v1143 = vld [vmem:[#allocation5] sm:$0xf]
        %v1144 = vld [vmem:[%s8] sm:$0xf]
        %v1145 = vld [vmem:[%s8 + $0x4] sm:$0xf]
        %v1146 = vld [vmem:[%s8 + $0x8] sm:$0xf]
        %v1147 = vld [vmem:[%s8 + $0xc] sm:$0xf]
        %v1152 = vunpack.c.l.b16 %v1144
        %v1153 = vunpack.c.l.b16 %v1145
        %v1154 = vunpack.c.l.b16 %v1146
        %v1155 = vunpack.c.l.b16 %v1147
        %v1156 = vpack.c.b16 %v1153, %v1152
        %v1157 = vpack.c.b16 %v1155, %v1154
        %v1161 = vsel %vm623, %v1143, 0
        %1163 = vmatprep.subr.bf16.mxu0 0
        %1164 = vmatpush1.bf16.msra.mxu0 %v1156
        %1165 = vmatprep.subr.bf16.mxu0 0
        %1166 = vmatpush1.bf16.msra.mxu0 %v1157
        %1167 = vmatprep.subr.bf16.mxu0 0
        %1168 = vmatpush1.bf16.msra.mxu0 0
        %1169 = vmatprep.subr.bf16.mxu0 0
        %1170 = vmatpush1.bf16.msra.mxu0 0
        %1171 = vmatprep.subr.bf16.mxu0 0
        %1172 = vmatpush1.bf16.msra.mxu0 0
        %1173 = vmatprep.subr.bf16.mxu0 0
        %1174 = vmatpush1.bf16.msra.mxu0 0
        %1175 = vmatprep.subr.bf16.mxu0 0
        %1176 = vmatpush1.bf16.msra.mxu0 0
        %1177 = vmatprep.subr.bf16.mxu0 0
        %1178 = vmatpush1.bf16.msra.mxu0 0
        %1179 = vmatprep.subr.bf16.mxu0 0
        %1180 = vmatpush1.bf16.msra.mxu0 0
        %1181 = vmatprep.subr.bf16.mxu0 0
        %1182 = vmatpush1.bf16.msra.mxu0 0
        %1183 = vmatprep.subr.bf16.mxu0 0
        %1184 = vmatpush1.bf16.msra.mxu0 0
        %1185 = vmatprep.subr.bf16.mxu0 0
        %1186 = vmatpush1.bf16.msra.mxu0 0
        %1187 = vmatprep.subr.bf16.mxu0 0
        %1188 = vmatpush1.bf16.msra.mxu0 0
        %1189 = vmatprep.subr.bf16.mxu0 0
        %1190 = vmatpush1.bf16.msra.mxu0 0
        %1191 = vmatprep.subr.bf16.mxu0 0
        %1192 = vmatpush1.bf16.msra.mxu0 0
        %1193 = vmatprep.subr.bf16.mxu0 0
        %1194 = vmatpush1.bf16.msra.mxu0 0
        %1195 = vmatprep.mubr.bf16.mxu0 0
        %1196 = vmatmul.mubr.bf16.gmra.mrb[0].mxu0 %v1161
        %v1197 = vpop.f32.mrb[0].mxu0
        %v1198 = vadd.f32 0.0, %v1197
        %v1199 = vpop.f32.mrb[0].mxu0
        %v1200 = vpop.f32.mrb[0].mxu0
        %v1201 = vpop.f32.mrb[0].mxu0
        %1202 = vdwg.mxu0
        %1203 = vst.msk [vmem:[%s433] sm:$0xff] %vm623, %v1198
        %s1204 = sand.u32 %s253, 1
        %s1205 = scalar_lea.sflag [#allocation8], %s1204
        %s1206 = sand.u32 %s253, 1
        %s1207 = smul.addr %s1206, 8
        %s1208 = scalar_lea.vmem [#allocation14], %s1207
        // Predicated region
        $region77: #{tpu_custom_call.1} parent=55 // pred_check
          %p1209 = pneg %p263
        $region78: #{tpu_custom_call.1} parent=55 // pred_check_branch
          %1211 = sbr.rel (%p1209) target = $region80
        $region79: #{tpu_custom_call.1} parent=55 // pred_region
          %s1213 = ssub.s32 128, 128
          %1214 = vsyncadd %s1205, %s1213
          %s1215 = sadd.s32 %s35, %s34
          %s1216 = smul.addr %s1215, 128
          %s1217 = scalar_lea.hbm %s9, %s1216
          %s1219 = sshll.u32 %s1208, 4
          %s1220 = int_to_ptr.vmem [resolvable:$true] %s1219
          %1222 = dma.vmem_to_hbm [thread:$0]  %s1220, 128, %s1217, %s1205
        $region80: #{tpu_custom_call.1} parent=55 // pred_fallthru
          _
      $region56: #{tpu_custom_call.1} parent=5 // pred_fallthru
        _
      %p1223 = scmp.le.s32.totalorder 2, %s25
      // Predicated region
      $region81: #{tpu_custom_call.1} parent=5 // pred_check
        %p1224 = pneg %p1223
      $region82: #{tpu_custom_call.1} parent=5 // pred_check_branch
        %1226 = sbr.rel (%p1224) target = $region84
      $region83: #{tpu_custom_call.1} parent=5 // pred_region
        %s1227 = ssub.s32 %s25, 2
        // Predicated region
        $region85: #{tpu_custom_call.1} parent=83 // pred_check
          %p1228 = pneg %p269
        $region86: #{tpu_custom_call.1} parent=83 // pred_check_branch
          %1230 = sbr.rel (%p1228) target = $region88
        $region87: #{tpu_custom_call.1} parent=83 // pred_region
          %s1231 = sand.u32 %s254, 1
          %s1232 = scalar_lea.sflag [#allocation8], %s1231
          %s1233 = sand.u32 %s254, 1
          %s1234 = smul.addr %s1233, 8
          %s1235 = scalar_lea.vmem [#allocation14], %s1234
          %1236 = dma.done %s1232, 128
        $region88: #{tpu_custom_call.1} parent=83 // pred_fallthru
          _
      $region84: #{tpu_custom_call.1} parent=5 // pred_fallthru
        _
    $region6: #{tpu_custom_call.1} parent=1 // loop_footer
      %s29 = sadd.s32 1, %s25
    $region7: #{tpu_custom_call.1} parent=1 // loop_footer_branch
      %24 = sbr.rel target = $region3
    $region8: #{tpu_custom_call.1} parent=1 // loop_exit
      _
    %1237 = vsyncpa [#allocation7], 1
    %s1238 = scalar_lea.sflag [#allocation7], 1
    %1239 = vsyncpa %s1238, 1
    %1240 = vsyncpa [#allocation10], 1
    %s1241 = scalar_lea.sflag [#allocation10], 1
    %1242 = vsyncpa %s1241, 1
    %1243 = vsyncpa [#allocation13], 1
    %1244 = vsyncpa [#allocation8], 1
    %s1245 = scalar_lea.sflag [#allocation8], 1
    %1246 = vsyncpa %s1245, 1

</llo_original>
